<compile_context>
chip_gen: v6e
topology: v6e:2x2x1
jax: 0.10.0
libtpu: 0.0.40
codegen_flags: <defaults>
</compile_context>

<pallas_src>
import functools

import jax
import jax.numpy as jnp
from jax.experimental import pallas as pl
from jax.experimental.pallas import tpu as pltpu


def _sigmoid(x):
    # Exact identity: sigmoid(x) = 0.5 * tanh(x/2) + 0.5.
    # tanh runs on the EUP (separate bundle slot), keeping the saturated VALU
    # free of the divide that 1/(1+exp(-x)) would generate.
    return 0.5 * jnp.tanh(0.5 * x) + 0.5


def mlp_kernel(x_ref, w1_ref, b1_ref, w2_ref, b2_ref, w3_ref, b3_ref, o_ref,
               *, chunk, unroll):
    """One batch tile of the fused MLP.

    x_ref : [8, TR, 128] bf16 VMEM tile (feature, batch-sublane-rows, batch-lanes)
    w*/b* : tiny (out,in)/(out,) f32 parameters resident in SMEM
    o_ref : [TR, 128] f32 output tile (same batch layout as x)

    Entirely VPU broadcast-FMA + EUP tanh; processed in `chunk`-row slabs so the
    working set stays in vregs.
    """
    tr = o_ref.shape[0]
    num_chunks = tr // chunk

    # Hoist all SMEM scalar reads out of the chunk loop (read once, reuse).
    W1 = [[w1_ref[j, k] for k in range(8)] for j in range(6)]
    B1 = [b1_ref[j] for j in range(6)]
    W2 = [[w2_ref[j, k] for k in range(6)] for j in range(4)]
    B2 = [b2_ref[j] for j in range(4)]
    W3 = [w3_ref[0, k] for k in range(4)]
    B3 = b3_ref[0]

    def body(c, carry):
        r = pl.multiple_of(c * chunk, chunk)

        # ---- Layer 1 (8 -> 6): k-outer / j-inner. Each bf16 plane is loaded
        # and upcast once, then reused for all 6 accumulators.
        x0 = x_ref[0, pl.ds(r, chunk), :].astype(jnp.float32)
        h1 = [x0 * W1[j][0] + B1[j] for j in range(6)]
        for k in range(1, 8):
            xk = x_ref[k, pl.ds(r, chunk), :].astype(jnp.float32)
            for j in range(6):
                h1[j] = h1[j] + xk * W1[j][k]
        h1 = [_sigmoid(h) for h in h1]

        # ---- Layer 2 (6 -> 4)
        h2 = [h1[0] * W2[j][0] + B2[j] for j in range(4)]
        for k in range(1, 6):
            for j in range(4):
                h2[j] = h2[j] + h1[k] * W2[j][k]
        h2 = [_sigmoid(h) for h in h2]

        # ---- Layer 3 (4 -> 1)
        acc = h2[0] * W3[0] + B3
        for k in range(1, 4):
            acc = acc + h2[k] * W3[k]
        o_ref[pl.ds(r, chunk), :] = _sigmoid(acc).astype(o_ref.dtype)
        return carry

    jax.lax.fori_loop(0, num_chunks, body, 0, unroll=min(unroll, num_chunks))


def _pick_tiles(n, lanes, chunk, max_rows):
    """Choose rows-per-tile so tiles are big but the grid has >=2 steps when
    there is enough work (v7x dual-TC split via dimension_semantics)."""
    rows = max(1, pl.cdiv(n, lanes))          # sublane-rows of real data
    chunks = pl.cdiv(rows, chunk)             # rows in units of `chunk`
    if chunks >= 2:
        tr = min(max_rows, chunk * pl.cdiv(chunks, 2))
    else:
        tr = chunk
    r_total = tr * pl.cdiv(rows, tr)
    return tr, r_total


def mlp_forward(x, w1, b1, w2, b2, w3, b3, *,
                in_dtype=jnp.bfloat16, lanes=128, chunk=16,
                max_rows=512, unroll=8):
    """Fused forward pass. x: [N, 8] f32; weights torch-style (out,in), bias (out,)."""
    n, f = x.shape
    assert f == 8

    tr, r_total = _pick_tiles(n, lanes, chunk, max_rows)
    n_pad = r_total * lanes
    grid = (r_total // tr,)

    # Feature-major, lane-dense, bf16-over-HBM layout: [8, r_total, lanes].
    # Cast is fused with the transpose+pad (single extra HBM pass).
    # TODO(synk): accept feature-major [8, N] activations upstream to drop this pass entirely.
    xt = jnp.pad(x.astype(in_dtype).T, ((0, 0), (0, n_pad - n)))
    xt = xt.reshape(8, r_total, lanes)

    kernel = functools.partial(mlp_kernel, chunk=chunk, unroll=unroll)
    smem = pl.BlockSpec(memory_space=pltpu.MemorySpace.SMEM)
    out = pl.pallas_call(
        kernel,
        out_shape=jax.ShapeDtypeStruct((r_total, lanes), jnp.float32),
        grid=grid,
        in_specs=[
            pl.BlockSpec((8, tr, lanes), lambda i: (0, i, 0)),   # x tile, pipelined
            smem, smem, smem, smem, smem, smem,                  # w1,b1,w2,b2,w3,b3
        ],
        out_specs=pl.BlockSpec((tr, lanes), lambda i: (i, 0)),
        compiler_params=pltpu.CompilerParams(
            dimension_semantics=("parallel",),        # batch tiles split across v7x's 2 TCs
            vmem_limit_bytes=32 * 1024 * 1024,        # explicit: v5e default is only 16 MiB
        ),
    )(xt, w1, b1, w2, b2, w3, b3)

    # Drop batch padding, back to [N, 1].
    return out.reshape(n_pad)[:n].reshape(n, 1)


def init_linear(key, fan_in, fan_out):
    # torch.nn.Linear default init: U(-1/sqrt(fan_in), 1/sqrt(fan_in)).
    # Weight stored torch-style (out_features, in_features), bias (out_features,).
    kw, kb = jax.random.split(key)
    bound = 1.0 / jnp.sqrt(jnp.float32(fan_in))
    w = jax.random.uniform(kw, (fan_out, fan_in), jnp.float32, -bound, bound)
    b = jax.random.uniform(kb, (fan_out,), jnp.float32, -bound, bound)
    return w, b


if __name__ == "__main__":
    key = jax.random.PRNGKey(0)
    kx, k1, k2, k3 = jax.random.split(key, 4)

    batch = 8
    x = jax.random.normal(kx, (batch, 8), jnp.float32)

    w1, b1 = init_linear(k1, 8, 6)
    w2, b2 = init_linear(k2, 6, 4)
    w3, b3 = init_linear(k3, 4, 1)

    out = jax.block_until_ready(mlp_forward(x, w1, b1, w2, b2, w3, b3))

    # Pure-JAX reference (same bf16-rounded inputs the kernel sees, f32 math).
    hp = jax.lax.Precision.HIGHEST
    xq = x.astype(jnp.bfloat16).astype(jnp.float32)
    ref = jax.nn.sigmoid(jnp.dot(xq, w1.T, precision=hp) + b1)
    ref = jax.nn.sigmoid(jnp.dot(ref, w2.T, precision=hp) + b2)
    ref = jax.nn.sigmoid(jnp.dot(ref, w3.T, precision=hp) + b3)

    assert out.shape == (batch, 1)
    # tanh-form sigmoid is mathematically exact; tolerance covers EUP-vs-XLA rounding.
    assert jnp.allclose(out, ref, atol=1e-4), "mismatch vs reference"
    print("KERNEL_OK")
</pallas_src>

<mosaic_0001>
module attributes {stable_mosaic.version = 11 : i64} {
  func.func @mlp_kernel(%arg0: i32, %arg1: memref<8x16x128xbf16, #tpu.memory_space<vmem>>, %arg2: memref<6x8xf32, #tpu.memory_space<smem>>, %arg3: memref<6xf32, #tpu.memory_space<smem>>, %arg4: memref<4x6xf32, #tpu.memory_space<smem>>, %arg5: memref<4xf32, #tpu.memory_space<smem>>, %arg6: memref<1x4xf32, #tpu.memory_space<smem>>, %arg7: memref<1xf32, #tpu.memory_space<smem>>, %arg8: memref<16x128xf32, #tpu.memory_space<vmem>>) attributes {dimension_semantics = [#tpu.dimension_semantics<parallel>], iteration_bounds = array<i64: 1>, scalar_prefetch = 0 : i64, scratch_operands = 0 : i64, tpu.core_type = #tpu.core_type<tc>, window_params = [{transform_indices = @transform_0, window_bounds = array<i64: 8, 16, 128>}, {transform_indices = @transform_1, window_bounds = array<i64: 6, 8>}, {transform_indices = @transform_2, window_bounds = array<i64: 6>}, {transform_indices = @transform_3, window_bounds = array<i64: 4, 6>}, {transform_indices = @transform_4, window_bounds = array<i64: 4>}, {transform_indices = @transform_5, window_bounds = array<i64: 1, 4>}, {transform_indices = @transform_6, window_bounds = array<i64: 1>}, {transform_indices = @transform_7, window_bounds = array<i64: 16, 128>}]} {
    %c0 = arith.constant 0 : index
    %c0_0 = arith.constant 0 : index
    %0 = memref.load %arg2[%c0, %c0_0] : memref<6x8xf32, #tpu.memory_space<smem>>
    %c0_1 = arith.constant 0 : index
    %c1 = arith.constant 1 : index
    %1 = memref.load %arg2[%c0_1, %c1] : memref<6x8xf32, #tpu.memory_space<smem>>
    %c0_2 = arith.constant 0 : index
    %c2 = arith.constant 2 : index
    %2 = memref.load %arg2[%c0_2, %c2] : memref<6x8xf32, #tpu.memory_space<smem>>
    %c0_3 = arith.constant 0 : index
    %c3 = arith.constant 3 : index
    %3 = memref.load %arg2[%c0_3, %c3] : memref<6x8xf32, #tpu.memory_space<smem>>
    %c0_4 = arith.constant 0 : index
    %c4 = arith.constant 4 : index
    %4 = memref.load %arg2[%c0_4, %c4] : memref<6x8xf32, #tpu.memory_space<smem>>
    %c0_5 = arith.constant 0 : index
    %c5 = arith.constant 5 : index
    %5 = memref.load %arg2[%c0_5, %c5] : memref<6x8xf32, #tpu.memory_space<smem>>
    %c0_6 = arith.constant 0 : index
    %c6 = arith.constant 6 : index
    %6 = memref.load %arg2[%c0_6, %c6] : memref<6x8xf32, #tpu.memory_space<smem>>
    %c0_7 = arith.constant 0 : index
    %c7 = arith.constant 7 : index
    %7 = memref.load %arg2[%c0_7, %c7] : memref<6x8xf32, #tpu.memory_space<smem>>
    %c1_8 = arith.constant 1 : index
    %c0_9 = arith.constant 0 : index
    %8 = memref.load %arg2[%c1_8, %c0_9] : memref<6x8xf32, #tpu.memory_space<smem>>
    %c1_10 = arith.constant 1 : index
    %c1_11 = arith.constant 1 : index
    %9 = memref.load %arg2[%c1_10, %c1_11] : memref<6x8xf32, #tpu.memory_space<smem>>
    %c1_12 = arith.constant 1 : index
    %c2_13 = arith.constant 2 : index
    %10 = memref.load %arg2[%c1_12, %c2_13] : memref<6x8xf32, #tpu.memory_space<smem>>
    %c1_14 = arith.constant 1 : index
    %c3_15 = arith.constant 3 : index
    %11 = memref.load %arg2[%c1_14, %c3_15] : memref<6x8xf32, #tpu.memory_space<smem>>
    %c1_16 = arith.constant 1 : index
    %c4_17 = arith.constant 4 : index
    %12 = memref.load %arg2[%c1_16, %c4_17] : memref<6x8xf32, #tpu.memory_space<smem>>
    %c1_18 = arith.constant 1 : index
    %c5_19 = arith.constant 5 : index
    %13 = memref.load %arg2[%c1_18, %c5_19] : memref<6x8xf32, #tpu.memory_space<smem>>
    %c1_20 = arith.constant 1 : index
    %c6_21 = arith.constant 6 : index
    %14 = memref.load %arg2[%c1_20, %c6_21] : memref<6x8xf32, #tpu.memory_space<smem>>
    %c1_22 = arith.constant 1 : index
    %c7_23 = arith.constant 7 : index
    %15 = memref.load %arg2[%c1_22, %c7_23] : memref<6x8xf32, #tpu.memory_space<smem>>
    %c2_24 = arith.constant 2 : index
    %c0_25 = arith.constant 0 : index
    %16 = memref.load %arg2[%c2_24, %c0_25] : memref<6x8xf32, #tpu.memory_space<smem>>
    %c2_26 = arith.constant 2 : index
    %c1_27 = arith.constant 1 : index
    %17 = memref.load %arg2[%c2_26, %c1_27] : memref<6x8xf32, #tpu.memory_space<smem>>
    %c2_28 = arith.constant 2 : index
    %c2_29 = arith.constant 2 : index
    %18 = memref.load %arg2[%c2_28, %c2_29] : memref<6x8xf32, #tpu.memory_space<smem>>
    %c2_30 = arith.constant 2 : index
    %c3_31 = arith.constant 3 : index
    %19 = memref.load %arg2[%c2_30, %c3_31] : memref<6x8xf32, #tpu.memory_space<smem>>
    %c2_32 = arith.constant 2 : index
    %c4_33 = arith.constant 4 : index
    %20 = memref.load %arg2[%c2_32, %c4_33] : memref<6x8xf32, #tpu.memory_space<smem>>
    %c2_34 = arith.constant 2 : index
    %c5_35 = arith.constant 5 : index
    %21 = memref.load %arg2[%c2_34, %c5_35] : memref<6x8xf32, #tpu.memory_space<smem>>
    %c2_36 = arith.constant 2 : index
    %c6_37 = arith.constant 6 : index
    %22 = memref.load %arg2[%c2_36, %c6_37] : memref<6x8xf32, #tpu.memory_space<smem>>
    %c2_38 = arith.constant 2 : index
    %c7_39 = arith.constant 7 : index
    %23 = memref.load %arg2[%c2_38, %c7_39] : memref<6x8xf32, #tpu.memory_space<smem>>
    %c3_40 = arith.constant 3 : index
    %c0_41 = arith.constant 0 : index
    %24 = memref.load %arg2[%c3_40, %c0_41] : memref<6x8xf32, #tpu.memory_space<smem>>
    %c3_42 = arith.constant 3 : index
    %c1_43 = arith.constant 1 : index
    %25 = memref.load %arg2[%c3_42, %c1_43] : memref<6x8xf32, #tpu.memory_space<smem>>
    %c3_44 = arith.constant 3 : index
    %c2_45 = arith.constant 2 : index
    %26 = memref.load %arg2[%c3_44, %c2_45] : memref<6x8xf32, #tpu.memory_space<smem>>
    %c3_46 = arith.constant 3 : index
    %c3_47 = arith.constant 3 : index
    %27 = memref.load %arg2[%c3_46, %c3_47] : memref<6x8xf32, #tpu.memory_space<smem>>
    %c3_48 = arith.constant 3 : index
    %c4_49 = arith.constant 4 : index
    %28 = memref.load %arg2[%c3_48, %c4_49] : memref<6x8xf32, #tpu.memory_space<smem>>
    %c3_50 = arith.constant 3 : index
    %c5_51 = arith.constant 5 : index
    %29 = memref.load %arg2[%c3_50, %c5_51] : memref<6x8xf32, #tpu.memory_space<smem>>
    %c3_52 = arith.constant 3 : index
    %c6_53 = arith.constant 6 : index
    %30 = memref.load %arg2[%c3_52, %c6_53] : memref<6x8xf32, #tpu.memory_space<smem>>
    %c3_54 = arith.constant 3 : index
    %c7_55 = arith.constant 7 : index
    %31 = memref.load %arg2[%c3_54, %c7_55] : memref<6x8xf32, #tpu.memory_space<smem>>
    %c4_56 = arith.constant 4 : index
    %c0_57 = arith.constant 0 : index
    %32 = memref.load %arg2[%c4_56, %c0_57] : memref<6x8xf32, #tpu.memory_space<smem>>
    %c4_58 = arith.constant 4 : index
    %c1_59 = arith.constant 1 : index
    %33 = memref.load %arg2[%c4_58, %c1_59] : memref<6x8xf32, #tpu.memory_space<smem>>
    %c4_60 = arith.constant 4 : index
    %c2_61 = arith.constant 2 : index
    %34 = memref.load %arg2[%c4_60, %c2_61] : memref<6x8xf32, #tpu.memory_space<smem>>
    %c4_62 = arith.constant 4 : index
    %c3_63 = arith.constant 3 : index
    %35 = memref.load %arg2[%c4_62, %c3_63] : memref<6x8xf32, #tpu.memory_space<smem>>
    %c4_64 = arith.constant 4 : index
    %c4_65 = arith.constant 4 : index
    %36 = memref.load %arg2[%c4_64, %c4_65] : memref<6x8xf32, #tpu.memory_space<smem>>
    %c4_66 = arith.constant 4 : index
    %c5_67 = arith.constant 5 : index
    %37 = memref.load %arg2[%c4_66, %c5_67] : memref<6x8xf32, #tpu.memory_space<smem>>
    %c4_68 = arith.constant 4 : index
    %c6_69 = arith.constant 6 : index
    %38 = memref.load %arg2[%c4_68, %c6_69] : memref<6x8xf32, #tpu.memory_space<smem>>
    %c4_70 = arith.constant 4 : index
    %c7_71 = arith.constant 7 : index
    %39 = memref.load %arg2[%c4_70, %c7_71] : memref<6x8xf32, #tpu.memory_space<smem>>
    %c5_72 = arith.constant 5 : index
    %c0_73 = arith.constant 0 : index
    %40 = memref.load %arg2[%c5_72, %c0_73] : memref<6x8xf32, #tpu.memory_space<smem>>
    %c5_74 = arith.constant 5 : index
    %c1_75 = arith.constant 1 : index
    %41 = memref.load %arg2[%c5_74, %c1_75] : memref<6x8xf32, #tpu.memory_space<smem>>
    %c5_76 = arith.constant 5 : index
    %c2_77 = arith.constant 2 : index
    %42 = memref.load %arg2[%c5_76, %c2_77] : memref<6x8xf32, #tpu.memory_space<smem>>
    %c5_78 = arith.constant 5 : index
    %c3_79 = arith.constant 3 : index
    %43 = memref.load %arg2[%c5_78, %c3_79] : memref<6x8xf32, #tpu.memory_space<smem>>
    %c5_80 = arith.constant 5 : index
    %c4_81 = arith.constant 4 : index
    %44 = memref.load %arg2[%c5_80, %c4_81] : memref<6x8xf32, #tpu.memory_space<smem>>
    %c5_82 = arith.constant 5 : index
    %c5_83 = arith.constant 5 : index
    %45 = memref.load %arg2[%c5_82, %c5_83] : memref<6x8xf32, #tpu.memory_space<smem>>
    %c5_84 = arith.constant 5 : index
    %c6_85 = arith.constant 6 : index
    %46 = memref.load %arg2[%c5_84, %c6_85] : memref<6x8xf32, #tpu.memory_space<smem>>
    %c5_86 = arith.constant 5 : index
    %c7_87 = arith.constant 7 : index
    %47 = memref.load %arg2[%c5_86, %c7_87] : memref<6x8xf32, #tpu.memory_space<smem>>
    %c0_88 = arith.constant 0 : index
    %48 = memref.load %arg3[%c0_88] : memref<6xf32, #tpu.memory_space<smem>>
    %c1_89 = arith.constant 1 : index
    %49 = memref.load %arg3[%c1_89] : memref<6xf32, #tpu.memory_space<smem>>
    %c2_90 = arith.constant 2 : index
    %50 = memref.load %arg3[%c2_90] : memref<6xf32, #tpu.memory_space<smem>>
    %c3_91 = arith.constant 3 : index
    %51 = memref.load %arg3[%c3_91] : memref<6xf32, #tpu.memory_space<smem>>
    %c4_92 = arith.constant 4 : index
    %52 = memref.load %arg3[%c4_92] : memref<6xf32, #tpu.memory_space<smem>>
    %c5_93 = arith.constant 5 : index
    %53 = memref.load %arg3[%c5_93] : memref<6xf32, #tpu.memory_space<smem>>
    %c0_94 = arith.constant 0 : index
    %c0_95 = arith.constant 0 : index
    %54 = memref.load %arg4[%c0_94, %c0_95] : memref<4x6xf32, #tpu.memory_space<smem>>
    %c0_96 = arith.constant 0 : index
    %c1_97 = arith.constant 1 : index
    %55 = memref.load %arg4[%c0_96, %c1_97] : memref<4x6xf32, #tpu.memory_space<smem>>
    %c0_98 = arith.constant 0 : index
    %c2_99 = arith.constant 2 : index
    %56 = memref.load %arg4[%c0_98, %c2_99] : memref<4x6xf32, #tpu.memory_space<smem>>
    %c0_100 = arith.constant 0 : index
    %c3_101 = arith.constant 3 : index
    %57 = memref.load %arg4[%c0_100, %c3_101] : memref<4x6xf32, #tpu.memory_space<smem>>
    %c0_102 = arith.constant 0 : index
    %c4_103 = arith.constant 4 : index
    %58 = memref.load %arg4[%c0_102, %c4_103] : memref<4x6xf32, #tpu.memory_space<smem>>
    %c0_104 = arith.constant 0 : index
    %c5_105 = arith.constant 5 : index
    %59 = memref.load %arg4[%c0_104, %c5_105] : memref<4x6xf32, #tpu.memory_space<smem>>
    %c1_106 = arith.constant 1 : index
    %c0_107 = arith.constant 0 : index
    %60 = memref.load %arg4[%c1_106, %c0_107] : memref<4x6xf32, #tpu.memory_space<smem>>
    %c1_108 = arith.constant 1 : index
    %c1_109 = arith.constant 1 : index
    %61 = memref.load %arg4[%c1_108, %c1_109] : memref<4x6xf32, #tpu.memory_space<smem>>
    %c1_110 = arith.constant 1 : index
    %c2_111 = arith.constant 2 : index
    %62 = memref.load %arg4[%c1_110, %c2_111] : memref<4x6xf32, #tpu.memory_space<smem>>
    %c1_112 = arith.constant 1 : index
    %c3_113 = arith.constant 3 : index
    %63 = memref.load %arg4[%c1_112, %c3_113] : memref<4x6xf32, #tpu.memory_space<smem>>
    %c1_114 = arith.constant 1 : index
    %c4_115 = arith.constant 4 : index
    %64 = memref.load %arg4[%c1_114, %c4_115] : memref<4x6xf32, #tpu.memory_space<smem>>
    %c1_116 = arith.constant 1 : index
    %c5_117 = arith.constant 5 : index
    %65 = memref.load %arg4[%c1_116, %c5_117] : memref<4x6xf32, #tpu.memory_space<smem>>
    %c2_118 = arith.constant 2 : index
    %c0_119 = arith.constant 0 : index
    %66 = memref.load %arg4[%c2_118, %c0_119] : memref<4x6xf32, #tpu.memory_space<smem>>
    %c2_120 = arith.constant 2 : index
    %c1_121 = arith.constant 1 : index
    %67 = memref.load %arg4[%c2_120, %c1_121] : memref<4x6xf32, #tpu.memory_space<smem>>
    %c2_122 = arith.constant 2 : index
    %c2_123 = arith.constant 2 : index
    %68 = memref.load %arg4[%c2_122, %c2_123] : memref<4x6xf32, #tpu.memory_space<smem>>
    %c2_124 = arith.constant 2 : index
    %c3_125 = arith.constant 3 : index
    %69 = memref.load %arg4[%c2_124, %c3_125] : memref<4x6xf32, #tpu.memory_space<smem>>
    %c2_126 = arith.constant 2 : index
    %c4_127 = arith.constant 4 : index
    %70 = memref.load %arg4[%c2_126, %c4_127] : memref<4x6xf32, #tpu.memory_space<smem>>
    %c2_128 = arith.constant 2 : index
    %c5_129 = arith.constant 5 : index
    %71 = memref.load %arg4[%c2_128, %c5_129] : memref<4x6xf32, #tpu.memory_space<smem>>
    %c3_130 = arith.constant 3 : index
    %c0_131 = arith.constant 0 : index
    %72 = memref.load %arg4[%c3_130, %c0_131] : memref<4x6xf32, #tpu.memory_space<smem>>
    %c3_132 = arith.constant 3 : index
    %c1_133 = arith.constant 1 : index
    %73 = memref.load %arg4[%c3_132, %c1_133] : memref<4x6xf32, #tpu.memory_space<smem>>
    %c3_134 = arith.constant 3 : index
    %c2_135 = arith.constant 2 : index
    %74 = memref.load %arg4[%c3_134, %c2_135] : memref<4x6xf32, #tpu.memory_space<smem>>
    %c3_136 = arith.constant 3 : index
    %c3_137 = arith.constant 3 : index
    %75 = memref.load %arg4[%c3_136, %c3_137] : memref<4x6xf32, #tpu.memory_space<smem>>
    %c3_138 = arith.constant 3 : index
    %c4_139 = arith.constant 4 : index
    %76 = memref.load %arg4[%c3_138, %c4_139] : memref<4x6xf32, #tpu.memory_space<smem>>
    %c3_140 = arith.constant 3 : index
    %c5_141 = arith.constant 5 : index
    %77 = memref.load %arg4[%c3_140, %c5_141] : memref<4x6xf32, #tpu.memory_space<smem>>
    %c0_142 = arith.constant 0 : index
    %78 = memref.load %arg5[%c0_142] : memref<4xf32, #tpu.memory_space<smem>>
    %c1_143 = arith.constant 1 : index
    %79 = memref.load %arg5[%c1_143] : memref<4xf32, #tpu.memory_space<smem>>
    %c2_144 = arith.constant 2 : index
    %80 = memref.load %arg5[%c2_144] : memref<4xf32, #tpu.memory_space<smem>>
    %c3_145 = arith.constant 3 : index
    %81 = memref.load %arg5[%c3_145] : memref<4xf32, #tpu.memory_space<smem>>
    %c0_146 = arith.constant 0 : index
    %c0_147 = arith.constant 0 : index
    %82 = memref.load %arg6[%c0_146, %c0_147] : memref<1x4xf32, #tpu.memory_space<smem>>
    %c0_148 = arith.constant 0 : index
    %c1_149 = arith.constant 1 : index
    %83 = memref.load %arg6[%c0_148, %c1_149] : memref<1x4xf32, #tpu.memory_space<smem>>
    %c0_150 = arith.constant 0 : index
    %c2_151 = arith.constant 2 : index
    %84 = memref.load %arg6[%c0_150, %c2_151] : memref<1x4xf32, #tpu.memory_space<smem>>
    %c0_152 = arith.constant 0 : index
    %c3_153 = arith.constant 3 : index
    %85 = memref.load %arg6[%c0_152, %c3_153] : memref<1x4xf32, #tpu.memory_space<smem>>
    %c0_154 = arith.constant 0 : index
    %86 = memref.load %arg7[%c0_154] : memref<1xf32, #tpu.memory_space<smem>>
    %c0_i32 = arith.constant 0 : i32
    %c16_i32 = arith.constant 16 : i32
    %87 = arith.muli %c0_i32, %c16_i32 : i32
    %88 = tpu.assume_multiple %87, 16 : i32
    %c0_155 = arith.constant 0 : index
    %89 = arith.index_cast %88 : i32 to index
    %c0_156 = arith.constant 0 : index
    %90 = vector.load %arg1[%c0_155, %89, %c0_156] : memref<8x16x128xbf16, #tpu.memory_space<vmem>>, vector<1x16x128xbf16>
    %91 = vector.shape_cast %90 : vector<1x16x128xbf16> to vector<16x128xbf16>
    %92 = arith.extf %91 : vector<16x128xbf16> to vector<16x128xf32>
    %93 = vector.broadcast %0 : f32 to vector<16x128xf32>
    %94 = arith.mulf %92, %93 : vector<16x128xf32>
    %95 = vector.broadcast %48 : f32 to vector<16x128xf32>
    %96 = arith.addf %94, %95 : vector<16x128xf32>
    %97 = vector.broadcast %8 : f32 to vector<16x128xf32>
    %98 = arith.mulf %92, %97 : vector<16x128xf32>
    %99 = vector.broadcast %49 : f32 to vector<16x128xf32>
    %100 = arith.addf %98, %99 : vector<16x128xf32>
    %101 = vector.broadcast %16 : f32 to vector<16x128xf32>
    %102 = arith.mulf %92, %101 : vector<16x128xf32>
    %103 = vector.broadcast %50 : f32 to vector<16x128xf32>
    %104 = arith.addf %102, %103 : vector<16x128xf32>
    %105 = vector.broadcast %24 : f32 to vector<16x128xf32>
    %106 = arith.mulf %92, %105 : vector<16x128xf32>
    %107 = vector.broadcast %51 : f32 to vector<16x128xf32>
    %108 = arith.addf %106, %107 : vector<16x128xf32>
    %109 = vector.broadcast %32 : f32 to vector<16x128xf32>
    %110 = arith.mulf %92, %109 : vector<16x128xf32>
    %111 = vector.broadcast %52 : f32 to vector<16x128xf32>
    %112 = arith.addf %110, %111 : vector<16x128xf32>
    %113 = vector.broadcast %40 : f32 to vector<16x128xf32>
    %114 = arith.mulf %92, %113 : vector<16x128xf32>
    %115 = vector.broadcast %53 : f32 to vector<16x128xf32>
    %116 = arith.addf %114, %115 : vector<16x128xf32>
    %c1_157 = arith.constant 1 : index
    %117 = arith.index_cast %88 : i32 to index
    %c0_158 = arith.constant 0 : index
    %118 = vector.load %arg1[%c1_157, %117, %c0_158] : memref<8x16x128xbf16, #tpu.memory_space<vmem>>, vector<1x16x128xbf16>
    %119 = vector.shape_cast %118 : vector<1x16x128xbf16> to vector<16x128xbf16>
    %120 = arith.extf %119 : vector<16x128xbf16> to vector<16x128xf32>
    %121 = vector.broadcast %1 : f32 to vector<16x128xf32>
    %122 = arith.mulf %120, %121 : vector<16x128xf32>
    %123 = arith.addf %96, %122 : vector<16x128xf32>
    %124 = vector.broadcast %9 : f32 to vector<16x128xf32>
    %125 = arith.mulf %120, %124 : vector<16x128xf32>
    %126 = arith.addf %100, %125 : vector<16x128xf32>
    %127 = vector.broadcast %17 : f32 to vector<16x128xf32>
    %128 = arith.mulf %120, %127 : vector<16x128xf32>
    %129 = arith.addf %104, %128 : vector<16x128xf32>
    %130 = vector.broadcast %25 : f32 to vector<16x128xf32>
    %131 = arith.mulf %120, %130 : vector<16x128xf32>
    %132 = arith.addf %108, %131 : vector<16x128xf32>
    %133 = vector.broadcast %33 : f32 to vector<16x128xf32>
    %134 = arith.mulf %120, %133 : vector<16x128xf32>
    %135 = arith.addf %112, %134 : vector<16x128xf32>
    %136 = vector.broadcast %41 : f32 to vector<16x128xf32>
    %137 = arith.mulf %120, %136 : vector<16x128xf32>
    %138 = arith.addf %116, %137 : vector<16x128xf32>
    %c2_159 = arith.constant 2 : index
    %139 = arith.index_cast %88 : i32 to index
    %c0_160 = arith.constant 0 : index
    %140 = vector.load %arg1[%c2_159, %139, %c0_160] : memref<8x16x128xbf16, #tpu.memory_space<vmem>>, vector<1x16x128xbf16>
    %141 = vector.shape_cast %140 : vector<1x16x128xbf16> to vector<16x128xbf16>
    %142 = arith.extf %141 : vector<16x128xbf16> to vector<16x128xf32>
    %143 = vector.broadcast %2 : f32 to vector<16x128xf32>
    %144 = arith.mulf %142, %143 : vector<16x128xf32>
    %145 = arith.addf %123, %144 : vector<16x128xf32>
    %146 = vector.broadcast %10 : f32 to vector<16x128xf32>
    %147 = arith.mulf %142, %146 : vector<16x128xf32>
    %148 = arith.addf %126, %147 : vector<16x128xf32>
    %149 = vector.broadcast %18 : f32 to vector<16x128xf32>
    %150 = arith.mulf %142, %149 : vector<16x128xf32>
    %151 = arith.addf %129, %150 : vector<16x128xf32>
    %152 = vector.broadcast %26 : f32 to vector<16x128xf32>
    %153 = arith.mulf %142, %152 : vector<16x128xf32>
    %154 = arith.addf %132, %153 : vector<16x128xf32>
    %155 = vector.broadcast %34 : f32 to vector<16x128xf32>
    %156 = arith.mulf %142, %155 : vector<16x128xf32>
    %157 = arith.addf %135, %156 : vector<16x128xf32>
    %158 = vector.broadcast %42 : f32 to vector<16x128xf32>
    %159 = arith.mulf %142, %158 : vector<16x128xf32>
    %160 = arith.addf %138, %159 : vector<16x128xf32>
    %c3_161 = arith.constant 3 : index
    %161 = arith.index_cast %88 : i32 to index
    %c0_162 = arith.constant 0 : index
    %162 = vector.load %arg1[%c3_161, %161, %c0_162] : memref<8x16x128xbf16, #tpu.memory_space<vmem>>, vector<1x16x128xbf16>
    %163 = vector.shape_cast %162 : vector<1x16x128xbf16> to vector<16x128xbf16>
    %164 = arith.extf %163 : vector<16x128xbf16> to vector<16x128xf32>
    %165 = vector.broadcast %3 : f32 to vector<16x128xf32>
    %166 = arith.mulf %164, %165 : vector<16x128xf32>
    %167 = arith.addf %145, %166 : vector<16x128xf32>
    %168 = vector.broadcast %11 : f32 to vector<16x128xf32>
    %169 = arith.mulf %164, %168 : vector<16x128xf32>
    %170 = arith.addf %148, %169 : vector<16x128xf32>
    %171 = vector.broadcast %19 : f32 to vector<16x128xf32>
    %172 = arith.mulf %164, %171 : vector<16x128xf32>
    %173 = arith.addf %151, %172 : vector<16x128xf32>
    %174 = vector.broadcast %27 : f32 to vector<16x128xf32>
    %175 = arith.mulf %164, %174 : vector<16x128xf32>
    %176 = arith.addf %154, %175 : vector<16x128xf32>
    %177 = vector.broadcast %35 : f32 to vector<16x128xf32>
    %178 = arith.mulf %164, %177 : vector<16x128xf32>
    %179 = arith.addf %157, %178 : vector<16x128xf32>
    %180 = vector.broadcast %43 : f32 to vector<16x128xf32>
    %181 = arith.mulf %164, %180 : vector<16x128xf32>
    %182 = arith.addf %160, %181 : vector<16x128xf32>
    %c4_163 = arith.constant 4 : index
    %183 = arith.index_cast %88 : i32 to index
    %c0_164 = arith.constant 0 : index
    %184 = vector.load %arg1[%c4_163, %183, %c0_164] : memref<8x16x128xbf16, #tpu.memory_space<vmem>>, vector<1x16x128xbf16>
    %185 = vector.shape_cast %184 : vector<1x16x128xbf16> to vector<16x128xbf16>
    %186 = arith.extf %185 : vector<16x128xbf16> to vector<16x128xf32>
    %187 = vector.broadcast %4 : f32 to vector<16x128xf32>
    %188 = arith.mulf %186, %187 : vector<16x128xf32>
    %189 = arith.addf %167, %188 : vector<16x128xf32>
    %190 = vector.broadcast %12 : f32 to vector<16x128xf32>
    %191 = arith.mulf %186, %190 : vector<16x128xf32>
    %192 = arith.addf %170, %191 : vector<16x128xf32>
    %193 = vector.broadcast %20 : f32 to vector<16x128xf32>
    %194 = arith.mulf %186, %193 : vector<16x128xf32>
    %195 = arith.addf %173, %194 : vector<16x128xf32>
    %196 = vector.broadcast %28 : f32 to vector<16x128xf32>
    %197 = arith.mulf %186, %196 : vector<16x128xf32>
    %198 = arith.addf %176, %197 : vector<16x128xf32>
    %199 = vector.broadcast %36 : f32 to vector<16x128xf32>
    %200 = arith.mulf %186, %199 : vector<16x128xf32>
    %201 = arith.addf %179, %200 : vector<16x128xf32>
    %202 = vector.broadcast %44 : f32 to vector<16x128xf32>
    %203 = arith.mulf %186, %202 : vector<16x128xf32>
    %204 = arith.addf %182, %203 : vector<16x128xf32>
    %c5_165 = arith.constant 5 : index
    %205 = arith.index_cast %88 : i32 to index
    %c0_166 = arith.constant 0 : index
    %206 = vector.load %arg1[%c5_165, %205, %c0_166] : memref<8x16x128xbf16, #tpu.memory_space<vmem>>, vector<1x16x128xbf16>
    %207 = vector.shape_cast %206 : vector<1x16x128xbf16> to vector<16x128xbf16>
    %208 = arith.extf %207 : vector<16x128xbf16> to vector<16x128xf32>
    %209 = vector.broadcast %5 : f32 to vector<16x128xf32>
    %210 = arith.mulf %208, %209 : vector<16x128xf32>
    %211 = arith.addf %189, %210 : vector<16x128xf32>
    %212 = vector.broadcast %13 : f32 to vector<16x128xf32>
    %213 = arith.mulf %208, %212 : vector<16x128xf32>
    %214 = arith.addf %192, %213 : vector<16x128xf32>
    %215 = vector.broadcast %21 : f32 to vector<16x128xf32>
    %216 = arith.mulf %208, %215 : vector<16x128xf32>
    %217 = arith.addf %195, %216 : vector<16x128xf32>
    %218 = vector.broadcast %29 : f32 to vector<16x128xf32>
    %219 = arith.mulf %208, %218 : vector<16x128xf32>
    %220 = arith.addf %198, %219 : vector<16x128xf32>
    %221 = vector.broadcast %37 : f32 to vector<16x128xf32>
    %222 = arith.mulf %208, %221 : vector<16x128xf32>
    %223 = arith.addf %201, %222 : vector<16x128xf32>
    %224 = vector.broadcast %45 : f32 to vector<16x128xf32>
    %225 = arith.mulf %208, %224 : vector<16x128xf32>
    %226 = arith.addf %204, %225 : vector<16x128xf32>
    %c6_167 = arith.constant 6 : index
    %227 = arith.index_cast %88 : i32 to index
    %c0_168 = arith.constant 0 : index
    %228 = vector.load %arg1[%c6_167, %227, %c0_168] : memref<8x16x128xbf16, #tpu.memory_space<vmem>>, vector<1x16x128xbf16>
    %229 = vector.shape_cast %228 : vector<1x16x128xbf16> to vector<16x128xbf16>
    %230 = arith.extf %229 : vector<16x128xbf16> to vector<16x128xf32>
    %231 = vector.broadcast %6 : f32 to vector<16x128xf32>
    %232 = arith.mulf %230, %231 : vector<16x128xf32>
    %233 = arith.addf %211, %232 : vector<16x128xf32>
    %234 = vector.broadcast %14 : f32 to vector<16x128xf32>
    %235 = arith.mulf %230, %234 : vector<16x128xf32>
    %236 = arith.addf %214, %235 : vector<16x128xf32>
    %237 = vector.broadcast %22 : f32 to vector<16x128xf32>
    %238 = arith.mulf %230, %237 : vector<16x128xf32>
    %239 = arith.addf %217, %238 : vector<16x128xf32>
    %240 = vector.broadcast %30 : f32 to vector<16x128xf32>
    %241 = arith.mulf %230, %240 : vector<16x128xf32>
    %242 = arith.addf %220, %241 : vector<16x128xf32>
    %243 = vector.broadcast %38 : f32 to vector<16x128xf32>
    %244 = arith.mulf %230, %243 : vector<16x128xf32>
    %245 = arith.addf %223, %244 : vector<16x128xf32>
    %246 = vector.broadcast %46 : f32 to vector<16x128xf32>
    %247 = arith.mulf %230, %246 : vector<16x128xf32>
    %248 = arith.addf %226, %247 : vector<16x128xf32>
    %c7_169 = arith.constant 7 : index
    %249 = arith.index_cast %88 : i32 to index
    %c0_170 = arith.constant 0 : index
    %250 = vector.load %arg1[%c7_169, %249, %c0_170] : memref<8x16x128xbf16, #tpu.memory_space<vmem>>, vector<1x16x128xbf16>
    %251 = vector.shape_cast %250 : vector<1x16x128xbf16> to vector<16x128xbf16>
    %252 = arith.extf %251 : vector<16x128xbf16> to vector<16x128xf32>
    %253 = vector.broadcast %7 : f32 to vector<16x128xf32>
    %254 = arith.mulf %252, %253 : vector<16x128xf32>
    %255 = arith.addf %233, %254 : vector<16x128xf32>
    %256 = vector.broadcast %15 : f32 to vector<16x128xf32>
    %257 = arith.mulf %252, %256 : vector<16x128xf32>
    %258 = arith.addf %236, %257 : vector<16x128xf32>
    %259 = vector.broadcast %23 : f32 to vector<16x128xf32>
    %260 = arith.mulf %252, %259 : vector<16x128xf32>
    %261 = arith.addf %239, %260 : vector<16x128xf32>
    %262 = vector.broadcast %31 : f32 to vector<16x128xf32>
    %263 = arith.mulf %252, %262 : vector<16x128xf32>
    %264 = arith.addf %242, %263 : vector<16x128xf32>
    %265 = vector.broadcast %39 : f32 to vector<16x128xf32>
    %266 = arith.mulf %252, %265 : vector<16x128xf32>
    %267 = arith.addf %245, %266 : vector<16x128xf32>
    %268 = vector.broadcast %47 : f32 to vector<16x128xf32>
    %269 = arith.mulf %252, %268 : vector<16x128xf32>
    %270 = arith.addf %248, %269 : vector<16x128xf32>
    %cst = arith.constant 5.000000e-01 : f32
    %271 = vector.broadcast %cst : f32 to vector<16x128xf32>
    %272 = arith.mulf %271, %255 : vector<16x128xf32>
    %273 = math.tanh %272 : vector<16x128xf32>
    %cst_171 = arith.constant 5.000000e-01 : f32
    %274 = vector.broadcast %cst_171 : f32 to vector<16x128xf32>
    %275 = arith.mulf %274, %273 : vector<16x128xf32>
    %cst_172 = arith.constant 5.000000e-01 : f32
    %276 = vector.broadcast %cst_172 : f32 to vector<16x128xf32>
    %277 = arith.addf %275, %276 : vector<16x128xf32>
    %cst_173 = arith.constant 5.000000e-01 : f32
    %278 = vector.broadcast %cst_173 : f32 to vector<16x128xf32>
    %279 = arith.mulf %278, %258 : vector<16x128xf32>
    %280 = math.tanh %279 : vector<16x128xf32>
    %cst_174 = arith.constant 5.000000e-01 : f32
    %281 = vector.broadcast %cst_174 : f32 to vector<16x128xf32>
    %282 = arith.mulf %281, %280 : vector<16x128xf32>
    %cst_175 = arith.constant 5.000000e-01 : f32
    %283 = vector.broadcast %cst_175 : f32 to vector<16x128xf32>
    %284 = arith.addf %282, %283 : vector<16x128xf32>
    %cst_176 = arith.constant 5.000000e-01 : f32
    %285 = vector.broadcast %cst_176 : f32 to vector<16x128xf32>
    %286 = arith.mulf %285, %261 : vector<16x128xf32>
    %287 = math.tanh %286 : vector<16x128xf32>
    %cst_177 = arith.constant 5.000000e-01 : f32
    %288 = vector.broadcast %cst_177 : f32 to vector<16x128xf32>
    %289 = arith.mulf %288, %287 : vector<16x128xf32>
    %cst_178 = arith.constant 5.000000e-01 : f32
    %290 = vector.broadcast %cst_178 : f32 to vector<16x128xf32>
    %291 = arith.addf %289, %290 : vector<16x128xf32>
    %cst_179 = arith.constant 5.000000e-01 : f32
    %292 = vector.broadcast %cst_179 : f32 to vector<16x128xf32>
    %293 = arith.mulf %292, %264 : vector<16x128xf32>
    %294 = math.tanh %293 : vector<16x128xf32>
    %cst_180 = arith.constant 5.000000e-01 : f32
    %295 = vector.broadcast %cst_180 : f32 to vector<16x128xf32>
    %296 = arith.mulf %295, %294 : vector<16x128xf32>
    %cst_181 = arith.constant 5.000000e-01 : f32
    %297 = vector.broadcast %cst_181 : f32 to vector<16x128xf32>
    %298 = arith.addf %296, %297 : vector<16x128xf32>
    %cst_182 = arith.constant 5.000000e-01 : f32
    %299 = vector.broadcast %cst_182 : f32 to vector<16x128xf32>
    %300 = arith.mulf %299, %267 : vector<16x128xf32>
    %301 = math.tanh %300 : vector<16x128xf32>
    %cst_183 = arith.constant 5.000000e-01 : f32
    %302 = vector.broadcast %cst_183 : f32 to vector<16x128xf32>
    %303 = arith.mulf %302, %301 : vector<16x128xf32>
    %cst_184 = arith.constant 5.000000e-01 : f32
    %304 = vector.broadcast %cst_184 : f32 to vector<16x128xf32>
    %305 = arith.addf %303, %304 : vector<16x128xf32>
    %cst_185 = arith.constant 5.000000e-01 : f32
    %306 = vector.broadcast %cst_185 : f32 to vector<16x128xf32>
    %307 = arith.mulf %306, %270 : vector<16x128xf32>
    %308 = math.tanh %307 : vector<16x128xf32>
    %cst_186 = arith.constant 5.000000e-01 : f32
    %309 = vector.broadcast %cst_186 : f32 to vector<16x128xf32>
    %310 = arith.mulf %309, %308 : vector<16x128xf32>
    %cst_187 = arith.constant 5.000000e-01 : f32
    %311 = vector.broadcast %cst_187 : f32 to vector<16x128xf32>
    %312 = arith.addf %310, %311 : vector<16x128xf32>
    %313 = vector.broadcast %54 : f32 to vector<16x128xf32>
    %314 = arith.mulf %277, %313 : vector<16x128xf32>
    %315 = vector.broadcast %78 : f32 to vector<16x128xf32>
    %316 = arith.addf %314, %315 : vector<16x128xf32>
    %317 = vector.broadcast %60 : f32 to vector<16x128xf32>
    %318 = arith.mulf %277, %317 : vector<16x128xf32>
    %319 = vector.broadcast %79 : f32 to vector<16x128xf32>
    %320 = arith.addf %318, %319 : vector<16x128xf32>
    %321 = vector.broadcast %66 : f32 to vector<16x128xf32>
    %322 = arith.mulf %277, %321 : vector<16x128xf32>
    %323 = vector.broadcast %80 : f32 to vector<16x128xf32>
    %324 = arith.addf %322, %323 : vector<16x128xf32>
    %325 = vector.broadcast %72 : f32 to vector<16x128xf32>
    %326 = arith.mulf %277, %325 : vector<16x128xf32>
    %327 = vector.broadcast %81 : f32 to vector<16x128xf32>
    %328 = arith.addf %326, %327 : vector<16x128xf32>
    %329 = vector.broadcast %55 : f32 to vector<16x128xf32>
    %330 = arith.mulf %284, %329 : vector<16x128xf32>
    %331 = arith.addf %316, %330 : vector<16x128xf32>
    %332 = vector.broadcast %61 : f32 to vector<16x128xf32>
    %333 = arith.mulf %284, %332 : vector<16x128xf32>
    %334 = arith.addf %320, %333 : vector<16x128xf32>
    %335 = vector.broadcast %67 : f32 to vector<16x128xf32>
    %336 = arith.mulf %284, %335 : vector<16x128xf32>
    %337 = arith.addf %324, %336 : vector<16x128xf32>
    %338 = vector.broadcast %73 : f32 to vector<16x128xf32>
    %339 = arith.mulf %284, %338 : vector<16x128xf32>
    %340 = arith.addf %328, %339 : vector<16x128xf32>
    %341 = vector.broadcast %56 : f32 to vector<16x128xf32>
    %342 = arith.mulf %291, %341 : vector<16x128xf32>
    %343 = arith.addf %331, %342 : vector<16x128xf32>
    %344 = vector.broadcast %62 : f32 to vector<16x128xf32>
    %345 = arith.mulf %291, %344 : vector<16x128xf32>
    %346 = arith.addf %334, %345 : vector<16x128xf32>
    %347 = vector.broadcast %68 : f32 to vector<16x128xf32>
    %348 = arith.mulf %291, %347 : vector<16x128xf32>
    %349 = arith.addf %337, %348 : vector<16x128xf32>
    %350 = vector.broadcast %74 : f32 to vector<16x128xf32>
    %351 = arith.mulf %291, %350 : vector<16x128xf32>
    %352 = arith.addf %340, %351 : vector<16x128xf32>
    %353 = vector.broadcast %57 : f32 to vector<16x128xf32>
    %354 = arith.mulf %298, %353 : vector<16x128xf32>
    %355 = arith.addf %343, %354 : vector<16x128xf32>
    %356 = vector.broadcast %63 : f32 to vector<16x128xf32>
    %357 = arith.mulf %298, %356 : vector<16x128xf32>
    %358 = arith.addf %346, %357 : vector<16x128xf32>
    %359 = vector.broadcast %69 : f32 to vector<16x128xf32>
    %360 = arith.mulf %298, %359 : vector<16x128xf32>
    %361 = arith.addf %349, %360 : vector<16x128xf32>
    %362 = vector.broadcast %75 : f32 to vector<16x128xf32>
    %363 = arith.mulf %298, %362 : vector<16x128xf32>
    %364 = arith.addf %352, %363 : vector<16x128xf32>
    %365 = vector.broadcast %58 : f32 to vector<16x128xf32>
    %366 = arith.mulf %305, %365 : vector<16x128xf32>
    %367 = arith.addf %355, %366 : vector<16x128xf32>
    %368 = vector.broadcast %64 : f32 to vector<16x128xf32>
    %369 = arith.mulf %305, %368 : vector<16x128xf32>
    %370 = arith.addf %358, %369 : vector<16x128xf32>
    %371 = vector.broadcast %70 : f32 to vector<16x128xf32>
    %372 = arith.mulf %305, %371 : vector<16x128xf32>
    %373 = arith.addf %361, %372 : vector<16x128xf32>
    %374 = vector.broadcast %76 : f32 to vector<16x128xf32>
    %375 = arith.mulf %305, %374 : vector<16x128xf32>
    %376 = arith.addf %364, %375 : vector<16x128xf32>
    %377 = vector.broadcast %59 : f32 to vector<16x128xf32>
    %378 = arith.mulf %312, %377 : vector<16x128xf32>
    %379 = arith.addf %367, %378 : vector<16x128xf32>
    %380 = vector.broadcast %65 : f32 to vector<16x128xf32>
    %381 = arith.mulf %312, %380 : vector<16x128xf32>
    %382 = arith.addf %370, %381 : vector<16x128xf32>
    %383 = vector.broadcast %71 : f32 to vector<16x128xf32>
    %384 = arith.mulf %312, %383 : vector<16x128xf32>
    %385 = arith.addf %373, %384 : vector<16x128xf32>
    %386 = vector.broadcast %77 : f32 to vector<16x128xf32>
    %387 = arith.mulf %312, %386 : vector<16x128xf32>
    %388 = arith.addf %376, %387 : vector<16x128xf32>
    %cst_188 = arith.constant 5.000000e-01 : f32
    %389 = vector.broadcast %cst_188 : f32 to vector<16x128xf32>
    %390 = arith.mulf %389, %379 : vector<16x128xf32>
    %391 = math.tanh %390 : vector<16x128xf32>
    %cst_189 = arith.constant 5.000000e-01 : f32
    %392 = vector.broadcast %cst_189 : f32 to vector<16x128xf32>
    %393 = arith.mulf %392, %391 : vector<16x128xf32>
    %cst_190 = arith.constant 5.000000e-01 : f32
    %394 = vector.broadcast %cst_190 : f32 to vector<16x128xf32>
    %395 = arith.addf %393, %394 : vector<16x128xf32>
    %cst_191 = arith.constant 5.000000e-01 : f32
    %396 = vector.broadcast %cst_191 : f32 to vector<16x128xf32>
    %397 = arith.mulf %396, %382 : vector<16x128xf32>
    %398 = math.tanh %397 : vector<16x128xf32>
    %cst_192 = arith.constant 5.000000e-01 : f32
    %399 = vector.broadcast %cst_192 : f32 to vector<16x128xf32>
    %400 = arith.mulf %399, %398 : vector<16x128xf32>
    %cst_193 = arith.constant 5.000000e-01 : f32
    %401 = vector.broadcast %cst_193 : f32 to vector<16x128xf32>
    %402 = arith.addf %400, %401 : vector<16x128xf32>
    %cst_194 = arith.constant 5.000000e-01 : f32
    %403 = vector.broadcast %cst_194 : f32 to vector<16x128xf32>
    %404 = arith.mulf %403, %385 : vector<16x128xf32>
    %405 = math.tanh %404 : vector<16x128xf32>
    %cst_195 = arith.constant 5.000000e-01 : f32
    %406 = vector.broadcast %cst_195 : f32 to vector<16x128xf32>
    %407 = arith.mulf %406, %405 : vector<16x128xf32>
    %cst_196 = arith.constant 5.000000e-01 : f32
    %408 = vector.broadcast %cst_196 : f32 to vector<16x128xf32>
    %409 = arith.addf %407, %408 : vector<16x128xf32>
    %cst_197 = arith.constant 5.000000e-01 : f32
    %410 = vector.broadcast %cst_197 : f32 to vector<16x128xf32>
    %411 = arith.mulf %410, %388 : vector<16x128xf32>
    %412 = math.tanh %411 : vector<16x128xf32>
    %cst_198 = arith.constant 5.000000e-01 : f32
    %413 = vector.broadcast %cst_198 : f32 to vector<16x128xf32>
    %414 = arith.mulf %413, %412 : vector<16x128xf32>
    %cst_199 = arith.constant 5.000000e-01 : f32
    %415 = vector.broadcast %cst_199 : f32 to vector<16x128xf32>
    %416 = arith.addf %414, %415 : vector<16x128xf32>
    %417 = vector.broadcast %82 : f32 to vector<16x128xf32>
    %418 = arith.mulf %395, %417 : vector<16x128xf32>
    %419 = vector.broadcast %86 : f32 to vector<16x128xf32>
    %420 = arith.addf %418, %419 : vector<16x128xf32>
    %421 = vector.broadcast %83 : f32 to vector<16x128xf32>
    %422 = arith.mulf %402, %421 : vector<16x128xf32>
    %423 = arith.addf %420, %422 : vector<16x128xf32>
    %424 = vector.broadcast %84 : f32 to vector<16x128xf32>
    %425 = arith.mulf %409, %424 : vector<16x128xf32>
    %426 = arith.addf %423, %425 : vector<16x128xf32>
    %427 = vector.broadcast %85 : f32 to vector<16x128xf32>
    %428 = arith.mulf %416, %427 : vector<16x128xf32>
    %429 = arith.addf %426, %428 : vector<16x128xf32>
    %cst_200 = arith.constant 5.000000e-01 : f32
    %430 = vector.broadcast %cst_200 : f32 to vector<16x128xf32>
    %431 = arith.mulf %430, %429 : vector<16x128xf32>
    %432 = math.tanh %431 : vector<16x128xf32>
    %cst_201 = arith.constant 5.000000e-01 : f32
    %433 = vector.broadcast %cst_201 : f32 to vector<16x128xf32>
    %434 = arith.mulf %433, %432 : vector<16x128xf32>
    %cst_202 = arith.constant 5.000000e-01 : f32
    %435 = vector.broadcast %cst_202 : f32 to vector<16x128xf32>
    %436 = arith.addf %434, %435 : vector<16x128xf32>
    %437 = arith.index_cast %88 : i32 to index
    %c0_203 = arith.constant 0 : index
    %438 = vector.load %arg8[%437, %c0_203] : memref<16x128xf32, #tpu.memory_space<vmem>>, vector<16x128xf32>
    tpu.vector_store %arg8[%437, %c0_203], %436 {strides = array<i32>} : memref<16x128xf32, #tpu.memory_space<vmem>>, vector<16x128xf32>,
    %c1_i32 = arith.constant 1 : i32
    return
  }
  func.func @transform_0(%arg0: i32) -> (i32, i32, i32) {
    %c0_i32 = arith.constant 0 : i32
    %c0_i32_0 = arith.constant 0 : i32
    %c0_i32_1 = arith.constant 0 : i32
    return %c0_i32, %arg0, %c0_i32_0 : i32, i32, i32
  }
  func.func @transform_1(%arg0: i32) -> (i32, i32) {
    %c0_i32 = arith.constant 0 : i32
    %c0_i32_0 = arith.constant 0 : i32
    %c0_i32_1 = arith.constant 0 : i32
    return %c0_i32, %c0_i32_0 : i32, i32
  }
  func.func @transform_2(%arg0: i32) -> i32 {
    %c0_i32 = arith.constant 0 : i32
    %c0_i32_0 = arith.constant 0 : i32
    return %c0_i32 : i32
  }
  func.func @transform_3(%arg0: i32) -> (i32, i32) {
    %c0_i32 = arith.constant 0 : i32
    %c0_i32_0 = arith.constant 0 : i32
    %c0_i32_1 = arith.constant 0 : i32
    return %c0_i32, %c0_i32_0 : i32, i32
  }
  func.func @transform_4(%arg0: i32) -> i32 {
    %c0_i32 = arith.constant 0 : i32
    %c0_i32_0 = arith.constant 0 : i32
    return %c0_i32 : i32
  }
  func.func @transform_5(%arg0: i32) -> (i32, i32) {
    %c0_i32 = arith.constant 0 : i32
    %c0_i32_0 = arith.constant 0 : i32
    %c0_i32_1 = arith.constant 0 : i32
    return %c0_i32, %c0_i32_0 : i32, i32
  }
  func.func @transform_6(%arg0: i32) -> i32 {
    %c0_i32 = arith.constant 0 : i32
    %c0_i32_0 = arith.constant 0 : i32
    return %c0_i32 : i32
  }
  func.func @transform_7(%arg0: i32) -> (i32, i32) {
    %c0_i32 = arith.constant 0 : i32
    %c0_i32_0 = arith.constant 0 : i32
    return %arg0, %c0_i32 : i32, i32
  }
}

</mosaic_0001>

<llo_original>
// kernel: tpu_custom_call.1
$region0: #{tpu_custom_call.1}
  #allocation0 [shape = 'u32[]', space=smem, size = 0x4, offset = 0x4, fixed_abs, tag = 'smem constant byte address 0x4 - core index']
  #allocation1 [shape = 'u32[144,128]{1,0:T(1,128)}', space=vmem, size = 0x12000, scoped, tag = 'internal scratch']
  #allocation2 [shape = 'f32[1]{0:T(128)S(6)}', space=smem, size = 0x200, scoped, tag = 'scoped memory for tpu_custom_call.1']
  %s0 = inlined_call_operand.hbm [shape: bf16[8,16,128], index: 0, kind: input, shape index: {}]
  %s1 = inlined_call_operand.hbm [shape: f32[6,8], index: 1, kind: input, shape index: {}]
  %s2 = inlined_call_operand.vmem [shape: f32[6], index: 2, kind: input, shape index: {}]
  %s3 = inlined_call_operand.vmem [shape: f32[4,6], index: 3, kind: input, shape index: {}]
  %s4 = inlined_call_operand.vmem [shape: f32[4], index: 4, kind: input, shape index: {}]
  %s5 = inlined_call_operand.vmem [shape: f32[1,4], index: 5, kind: input, shape index: {}]
  %s6 = inlined_call_operand.<no memory space> [shape: f32[1], index: 6, kind: input, shape index: {}]
  %s7 = inlined_call_operand.hbm [shape: f32[16,128], index: 7, kind: output, shape index: {}]
  %s8 = sld [smem:[#allocation0]]
  $region62: #{tpu_custom_call.1} parent=0
    _
  %s10 = ssub.s32 1, %s8
  %s11 = scalar_select 0, %s10, %s8
  %12 = sst [smem:[#allocation2]] %s6
  $region1: #{tpu_custom_call.1} parent=0
    #allocation3 [shape = 'u8[32768]{0}', space=vmem, size = 0x8000, scoped, tag = 'input window, operand 0, single buffered']
    #allocation4 [shape = 's32[1]{0}', space=sflag, size = 0x4, scoped, tag = 'scoped memory for tpu_custom_call.1']
    #allocation5 [shape = 's32[1]{0}', space=sflag, size = 0x4, scoped, tag = 'scoped memory for tpu_custom_call.1']
    #allocation6 [shape = 's32[1]{0}', space=sflag, size = 0x4, scoped, tag = 'scoped memory for tpu_custom_call.1']
    #allocation7 [shape = 's32[1]{0}', space=sflag, size = 0x4, scoped, tag = 'scoped memory for tpu_custom_call.1']
    #allocation8 [shape = 'u8[4096]{0}', space=smem, size = 0x1000, scoped, tag = 'input window, operand 1, single buffered']
    #allocation9 [shape = 'u8[512]{0}', space=smem, size = 0x200, scoped, tag = 'input window, operand 2, single buffered']
    #allocation10 [shape = 'u8[2048]{0}', space=smem, size = 0x800, scoped, tag = 'input window, operand 3, single buffered']
    #allocation11 [shape = 's32[1]{0}', space=sflag, size = 0x4, scoped, tag = 'scoped memory for tpu_custom_call.1']
    #allocation12 [shape = 'u8[512]{0}', space=smem, size = 0x200, scoped, tag = 'input window, operand 4, single buffered']
    #allocation13 [shape = 'u8[512]{0}', space=smem, size = 0x200, scoped, tag = 'input window, operand 5, single buffered']
    #allocation14 [shape = 's32[1]{0}', space=sflag, size = 0x4, scoped, tag = 'scoped memory for tpu_custom_call.1']
    #allocation15 [shape = 'u8[8192]{0}', space=vmem, size = 0x2000, scoped, tag = 'output window, operand 0, single buffered']
    %13 = vsyncpa [#allocation4], 0
    %14 = vsyncpa [#allocation6], 0
    %15 = vsyncpa [#allocation7], 0
    %16 = vsyncpa [#allocation11], 0
    %17 = vsyncpa [#allocation14], 0
    %18 = vsyncpa [#allocation5], 0
    // Predicated region
    $region2: #{tpu_custom_call.1} parent=1 // pred_check
      _
    $region3: #{tpu_custom_call.1} parent=1 // pred_check_branch
      %20 = sbr.rel (0) target = $region5
    $region4: #{tpu_custom_call.1} parent=1 // pred_region
      %s22 = ssub.s32 1024, 1024
      %23 = vsyncadd [#allocation4], %s22
      %s24 = sshll.u32 [#allocation3], 4
      %s25 = int_to_ptr.vmem [resolvable:$true] %s24
      %30 = dma.hbm_to_vmem [thread:$0]  %s0, 1024, %s25, [#allocation4], 64, 64, 4
    $region5: #{tpu_custom_call.1} parent=1 // pred_fallthru
      _
    // Predicated region
    $region6: #{tpu_custom_call.1} parent=1 // pred_check
      _
    $region7: #{tpu_custom_call.1} parent=1 // pred_check_branch
      %32 = sbr.rel (0) target = $region9
    $region8: #{tpu_custom_call.1} parent=1 // pred_region
      %s34 = ssub.s32 128, 128
      %35 = vsyncadd [#allocation6], %s34
      %38 = dma.hbm_to_smem %s1, 128, [#allocation8], [#allocation6]
    $region9: #{tpu_custom_call.1} parent=1 // pred_fallthru
      _
    // Predicated region
    $region10: #{tpu_custom_call.1} parent=1 // pred_check
      _
    $region11: #{tpu_custom_call.1} parent=1 // pred_check_branch
      %40 = sbr.rel (0) target = $region13
    $region12: #{tpu_custom_call.1} parent=1 // pred_region
      %s42 = ssub.s32 16, 16
      %43 = vsyncadd [#allocation7], %s42
      %s45 = sshll.u32 %s2, 4
      %s46 = int_to_ptr.vmem [resolvable:$true] %s45
      %48 = dma.vmem_to_smem %s46, 16, [#allocation9], [#allocation7]
    $region13: #{tpu_custom_call.1} parent=1 // pred_fallthru
      _
    // Predicated region
    $region14: #{tpu_custom_call.1} parent=1 // pred_check
      _
    $region15: #{tpu_custom_call.1} parent=1 // pred_check_branch
      %50 = sbr.rel (0) target = $region17
    $region16: #{tpu_custom_call.1} parent=1 // pred_region
      %s52 = ssub.s32 64, 64
      %53 = vsyncadd [#allocation11], %s52
      %s55 = sshll.u32 %s3, 4
      %s56 = int_to_ptr.vmem [resolvable:$true] %s55
      %58 = dma.vmem_to_smem %s56, 64, [#allocation10], [#allocation11]
    $region17: #{tpu_custom_call.1} parent=1 // pred_fallthru
      _
    // Predicated region
    $region18: #{tpu_custom_call.1} parent=1 // pred_check
      _
    $region19: #{tpu_custom_call.1} parent=1 // pred_check_branch
      %60 = sbr.rel (0) target = $region21
    $region20: #{tpu_custom_call.1} parent=1 // pred_region
      %s62 = ssub.s32 16, 16
      %63 = vsyncadd [#allocation11], %s62
      %s65 = sshll.u32 %s4, 4
      %s66 = int_to_ptr.vmem [resolvable:$true] %s65
      %68 = dma.vmem_to_smem %s66, 16, [#allocation12], [#allocation11]
    $region21: #{tpu_custom_call.1} parent=1 // pred_fallthru
      _
    // Predicated region
    $region22: #{tpu_custom_call.1} parent=1 // pred_check
      _
    $region23: #{tpu_custom_call.1} parent=1 // pred_check_branch
      %70 = sbr.rel (0) target = $region25
    $region24: #{tpu_custom_call.1} parent=1 // pred_region
      %s72 = ssub.s32 16, 16
      %73 = vsyncadd [#allocation14], %s72
      %s75 = sshll.u32 %s5, 4
      %s76 = int_to_ptr.vmem [resolvable:$true] %s75
      %78 = dma.vmem_to_smem %s76, 16, [#allocation13], [#allocation14]
    $region25: #{tpu_custom_call.1} parent=1 // pred_fallthru
      _
    // Predicated region
    $region26: #{tpu_custom_call.1} parent=1 // pred_check
      _
    $region27: #{tpu_custom_call.1} parent=1 // pred_check_branch
      %80 = sbr.rel (0) target = $region29
    $region28: #{tpu_custom_call.1} parent=1 // pred_region
      _
    $region29: #{tpu_custom_call.1} parent=1 // pred_fallthru
      _
    // Predicated region
    $region30: #{tpu_custom_call.1} parent=1 // pred_check
      _
    $region31: #{tpu_custom_call.1} parent=1 // pred_check_branch
      %82 = sbr.rel (0) target = $region33
    $region32: #{tpu_custom_call.1} parent=1 // pred_region
      %83 = dma.done [#allocation4], 1024
    $region33: #{tpu_custom_call.1} parent=1 // pred_fallthru
      _
    // Predicated region
    $region34: #{tpu_custom_call.1} parent=1 // pred_check
      _
    $region35: #{tpu_custom_call.1} parent=1 // pred_check_branch
      %85 = sbr.rel (0) target = $region37
    $region36: #{tpu_custom_call.1} parent=1 // pred_region
      %86 = dma.done [#allocation6], 128
    $region37: #{tpu_custom_call.1} parent=1 // pred_fallthru
      _
    // Predicated region
    $region38: #{tpu_custom_call.1} parent=1 // pred_check
      _
    $region39: #{tpu_custom_call.1} parent=1 // pred_check_branch
      %88 = sbr.rel (0) target = $region41
    $region40: #{tpu_custom_call.1} parent=1 // pred_region
      %89 = dma.done [#allocation7], 16
    $region41: #{tpu_custom_call.1} parent=1 // pred_fallthru
      _
    // Predicated region
    $region42: #{tpu_custom_call.1} parent=1 // pred_check
      _
    $region43: #{tpu_custom_call.1} parent=1 // pred_check_branch
      %91 = sbr.rel (0) target = $region45
    $region44: #{tpu_custom_call.1} parent=1 // pred_region
      %92 = dma.done [#allocation11], 64
    $region45: #{tpu_custom_call.1} parent=1 // pred_fallthru
      _
    // Predicated region
    $region46: #{tpu_custom_call.1} parent=1 // pred_check
      _
    $region47: #{tpu_custom_call.1} parent=1 // pred_check_branch
      %94 = sbr.rel (0) target = $region49
    $region48: #{tpu_custom_call.1} parent=1 // pred_region
      %95 = dma.done [#allocation11], 16
    $region49: #{tpu_custom_call.1} parent=1 // pred_fallthru
      _
    // Predicated region
    $region50: #{tpu_custom_call.1} parent=1 // pred_check
      _
    $region51: #{tpu_custom_call.1} parent=1 // pred_check_branch
      %97 = sbr.rel (0) target = $region53
    $region52: #{tpu_custom_call.1} parent=1 // pred_region
      %98 = dma.done [#allocation14], 16
    $region53: #{tpu_custom_call.1} parent=1 // pred_fallthru
      _
    %99 = sfence
    %s100 = sld [smem:[#allocation8]]
    %s101 = sld [smem:[#allocation8 + $0x1]]
    %s102 = sld [smem:[#allocation8 + $0x2]]
    %s103 = sld [smem:[#allocation8 + $0x3]]
    %s104 = sld [smem:[#allocation8 + $0x4]]
    %s105 = sld [smem:[#allocation8 + $0x5]]
    %s106 = sld [smem:[#allocation8 + $0x6]]
    %s107 = sld [smem:[#allocation8 + $0x7]]
    %s108 = sld [smem:[#allocation8 + $0x80]]
    %s109 = sld [smem:[#allocation8 + $0x81]]
    %s110 = sld [smem:[#allocation8 + $0x82]]
    %s111 = sld [smem:[#allocation8 + $0x83]]
    %s112 = sld [smem:[#allocation8 + $0x84]]
    %s113 = sld [smem:[#allocation8 + $0x85]]
    %s114 = sld [smem:[#allocation8 + $0x86]]
    %s115 = sld [smem:[#allocation8 + $0x87]]
    %s116 = sld [smem:[#allocation8 + $0x100]]
    %s117 = sld [smem:[#allocation8 + $0x101]]
    %s118 = sld [smem:[#allocation8 + $0x102]]
    %s119 = sld [smem:[#allocation8 + $0x103]]
    %s120 = sld [smem:[#allocation8 + $0x104]]
    %s121 = sld [smem:[#allocation8 + $0x105]]
    %s122 = sld [smem:[#allocation8 + $0x106]]
    %s123 = sld [smem:[#allocation8 + $0x107]]
    %s124 = sld [smem:[#allocation8 + $0x180]]
    %s125 = sld [smem:[#allocation8 + $0x181]]
    %s126 = sld [smem:[#allocation8 + $0x182]]
    %s127 = sld [smem:[#allocation8 + $0x183]]
    %s128 = sld [smem:[#allocation8 + $0x184]]
    %s129 = sld [smem:[#allocation8 + $0x185]]
    %s130 = sld [smem:[#allocation8 + $0x186]]
    %s131 = sld [smem:[#allocation8 + $0x187]]
    %s132 = sld [smem:[#allocation8 + $0x200]]
    %s133 = sld [smem:[#allocation8 + $0x201]]
    %s134 = sld [smem:[#allocation8 + $0x202]]
    %s135 = sld [smem:[#allocation8 + $0x203]]
    %s136 = sld [smem:[#allocation8 + $0x204]]
    %s137 = sld [smem:[#allocation8 + $0x205]]
    %s138 = sld [smem:[#allocation8 + $0x206]]
    %s139 = sld [smem:[#allocation8 + $0x207]]
    %s140 = sld [smem:[#allocation8 + $0x280]]
    %s141 = sld [smem:[#allocation8 + $0x281]]
    %s142 = sld [smem:[#allocation8 + $0x282]]
    %s143 = sld [smem:[#allocation8 + $0x283]]
    %s144 = sld [smem:[#allocation8 + $0x284]]
    %s145 = sld [smem:[#allocation8 + $0x285]]
    %s146 = sld [smem:[#allocation8 + $0x286]]
    %s147 = sld [smem:[#allocation8 + $0x287]]
    %s148 = sld [smem:[#allocation9]]
    %s149 = sld [smem:[#allocation9 + $0x1]]
    %s150 = sld [smem:[#allocation9 + $0x2]]
    %s151 = sld [smem:[#allocation9 + $0x3]]
    %s152 = sld [smem:[#allocation9 + $0x4]]
    %s153 = sld [smem:[#allocation9 + $0x5]]
    %s154 = sld [smem:[#allocation10]]
    %s155 = sld [smem:[#allocation10 + $0x1]]
    %s156 = sld [smem:[#allocation10 + $0x2]]
    %s157 = sld [smem:[#allocation10 + $0x3]]
    %s158 = sld [smem:[#allocation10 + $0x4]]
    %s159 = sld [smem:[#allocation10 + $0x5]]
    %s160 = sld [smem:[#allocation10 + $0x80]]
    %s161 = sld [smem:[#allocation10 + $0x81]]
    %s162 = sld [smem:[#allocation10 + $0x82]]
    %s163 = sld [smem:[#allocation10 + $0x83]]
    %s164 = sld [smem:[#allocation10 + $0x84]]
    %s165 = sld [smem:[#allocation10 + $0x85]]
    %s166 = sld [smem:[#allocation10 + $0x100]]
    %s167 = sld [smem:[#allocation10 + $0x101]]
    %s168 = sld [smem:[#allocation10 + $0x102]]
    %s169 = sld [smem:[#allocation10 + $0x103]]
    %s170 = sld [smem:[#allocation10 + $0x104]]
    %s171 = sld [smem:[#allocation10 + $0x105]]
    %s172 = sld [smem:[#allocation10 + $0x180]]
    %s173 = sld [smem:[#allocation10 + $0x181]]
    %s174 = sld [smem:[#allocation10 + $0x182]]
    %s175 = sld [smem:[#allocation10 + $0x183]]
    %s176 = sld [smem:[#allocation10 + $0x184]]
    %s177 = sld [smem:[#allocation10 + $0x185]]
    %s178 = sld [smem:[#allocation12]]
    %s179 = sld [smem:[#allocation12 + $0x1]]
    %s180 = sld [smem:[#allocation12 + $0x2]]
    %s181 = sld [smem:[#allocation12 + $0x3]]
    %s182 = sld [smem:[#allocation13]]
    %s183 = sld [smem:[#allocation13 + $0x1]]
    %s184 = sld [smem:[#allocation13 + $0x2]]
    %s185 = sld [smem:[#allocation13 + $0x3]]
    %s186 = sld [smem:[#allocation2]]
    %v187 = vld [vmem:[#allocation3] sm:$0xf]
    %v188 = vld [vmem:[#allocation3 + $0x4] sm:$0xf]
    %v189 = vunpack.c.l.bf16 %v187
    %v190 = vunpack.c.l.bf16 %v188
    %v191 = vstv %s100
    %v192 = vmul.f32 %v189, %v191
    %v193 = vmul.f32 %v190, %v191
    %v194 = vstv %s148
    %v195 = vadd.f32 %v192, %v194
    %v196 = vadd.f32 %v193, %v194
    %v197 = vstv %s108
    %v198 = vmul.f32 %v189, %v197
    %v199 = vmul.f32 %v190, %v197
    %v200 = vstv %s149
    %v201 = vadd.f32 %v198, %v200
    %v202 = vadd.f32 %v199, %v200
    %v203 = vstv %s116
    %v204 = vmul.f32 %v189, %v203
    %v205 = vmul.f32 %v190, %v203
    %v206 = vstv %s150
    %v207 = vadd.f32 %v204, %v206
    %v208 = vadd.f32 %v205, %v206
    %v209 = vstv %s124
    %v210 = vmul.f32 %v189, %v209
    %v211 = vmul.f32 %v190, %v209
    %v212 = vstv %s151
    %v213 = vadd.f32 %v210, %v212
    %v214 = vadd.f32 %v211, %v212
    %v215 = vstv %s132
    %v216 = vmul.f32 %v189, %v215
    %v217 = vmul.f32 %v190, %v215
    %v218 = vstv %s152
    %v219 = vadd.f32 %v216, %v218
    %v220 = vadd.f32 %v217, %v218
    %v221 = vstv %s140
    %v222 = vmul.f32 %v189, %v221
    %v223 = vmul.f32 %v190, %v221
    %v224 = vstv %s153
    %v225 = vadd.f32 %v222, %v224
    %v226 = vadd.f32 %v223, %v224
    %s227 = sadd.s32 0, 2
    %s228 = smul.addr %s227, 4
    %s229 = scalar_lea.vmem [#allocation3], %s228
    %v230 = vld [vmem:[%s229] sm:$0xf]
    %v231 = vld [vmem:[%s229 + $0x4] sm:$0xf]
    %v232 = vunpack.c.l.bf16 %v230
    %v233 = vunpack.c.l.bf16 %v231
    %v234 = vstv %s101
    %v235 = vmul.f32 %v232, %v234
    %v236 = vmul.f32 %v233, %v234
    %v237 = vadd.f32 %v195, %v235
    %v238 = vadd.f32 %v196, %v236
    %v239 = vstv %s109
    %v240 = vmul.f32 %v232, %v239
    %v241 = vmul.f32 %v233, %v239
    %v242 = vadd.f32 %v201, %v240
    %v243 = vadd.f32 %v202, %v241
    %v244 = vstv %s117
    %v245 = vmul.f32 %v232, %v244
    %v246 = vmul.f32 %v233, %v244
    %v247 = vadd.f32 %v207, %v245
    %v248 = vadd.f32 %v208, %v246
    %v249 = vstv %s125
    %v250 = vmul.f32 %v232, %v249
    %v251 = vmul.f32 %v233, %v249
    %v252 = vadd.f32 %v213, %v250
    %v253 = vadd.f32 %v214, %v251
    %v254 = vstv %s133
    %v255 = vmul.f32 %v232, %v254
    %v256 = vmul.f32 %v233, %v254
    %v257 = vadd.f32 %v219, %v255
    %v258 = vadd.f32 %v220, %v256
    %v259 = vstv %s141
    %v260 = vmul.f32 %v232, %v259
    %v261 = vmul.f32 %v233, %v259
    %v262 = vadd.f32 %v225, %v260
    %v263 = vadd.f32 %v226, %v261
    %s264 = sadd.s32 0, 4
    %s265 = smul.addr %s264, 4
    %s266 = scalar_lea.vmem [#allocation3], %s265
    %v267 = vld [vmem:[%s266] sm:$0xf]
    %v268 = vld [vmem:[%s266 + $0x4] sm:$0xf]
    %v269 = vunpack.c.l.bf16 %v267
    %v270 = vunpack.c.l.bf16 %v268
    %v271 = vstv %s102
    %v272 = vmul.f32 %v269, %v271
    %v273 = vmul.f32 %v270, %v271
    %v274 = vadd.f32 %v237, %v272
    %v275 = vadd.f32 %v238, %v273
    %v276 = vstv %s110
    %v277 = vmul.f32 %v269, %v276
    %v278 = vmul.f32 %v270, %v276
    %v279 = vadd.f32 %v242, %v277
    %v280 = vadd.f32 %v243, %v278
    %v281 = vstv %s118
    %v282 = vmul.f32 %v269, %v281
    %v283 = vmul.f32 %v270, %v281
    %v284 = vadd.f32 %v247, %v282
    %v285 = vadd.f32 %v248, %v283
    %v286 = vstv %s126
    %v287 = vmul.f32 %v269, %v286
    %v288 = vmul.f32 %v270, %v286
    %v289 = vadd.f32 %v252, %v287
    %v290 = vadd.f32 %v253, %v288
    %v291 = vstv %s134
    %v292 = vmul.f32 %v269, %v291
    %v293 = vmul.f32 %v270, %v291
    %v294 = vadd.f32 %v257, %v292
    %v295 = vadd.f32 %v258, %v293
    %v296 = vstv %s142
    %v297 = vmul.f32 %v269, %v296
    %v298 = vmul.f32 %v270, %v296
    %v299 = vadd.f32 %v262, %v297
    %v300 = vadd.f32 %v263, %v298
    %s301 = sadd.s32 0, 6
    %s302 = smul.addr %s301, 4
    %s303 = scalar_lea.vmem [#allocation3], %s302
    %v304 = vld [vmem:[%s303] sm:$0xf]
    %v305 = vld [vmem:[%s303 + $0x4] sm:$0xf]
    %v306 = vunpack.c.l.bf16 %v304
    %v307 = vunpack.c.l.bf16 %v305
    %v308 = vstv %s103
    %v309 = vmul.f32 %v306, %v308
    %v310 = vmul.f32 %v307, %v308
    %v311 = vadd.f32 %v274, %v309
    %v312 = vadd.f32 %v275, %v310
    %v313 = vstv %s111
    %v314 = vmul.f32 %v306, %v313
    %v315 = vmul.f32 %v307, %v313
    %v316 = vadd.f32 %v279, %v314
    %v317 = vadd.f32 %v280, %v315
    %v318 = vstv %s119
    %v319 = vmul.f32 %v306, %v318
    %v320 = vmul.f32 %v307, %v318
    %v321 = vadd.f32 %v284, %v319
    %v322 = vadd.f32 %v285, %v320
    %v323 = vstv %s127
    %v324 = vmul.f32 %v306, %v323
    %v325 = vmul.f32 %v307, %v323
    %v326 = vadd.f32 %v289, %v324
    %v327 = vadd.f32 %v290, %v325
    %v328 = vstv %s135
    %v329 = vmul.f32 %v306, %v328
    %v330 = vmul.f32 %v307, %v328
    %v331 = vadd.f32 %v294, %v329
    %v332 = vadd.f32 %v295, %v330
    %v333 = vstv %s143
    %v334 = vmul.f32 %v306, %v333
    %v335 = vmul.f32 %v307, %v333
    %v336 = vadd.f32 %v299, %v334
    %v337 = vadd.f32 %v300, %v335
    %s338 = sadd.s32 0, 8
    %s339 = smul.addr %s338, 4
    %s340 = scalar_lea.vmem [#allocation3], %s339
    %v341 = vld [vmem:[%s340] sm:$0xf]
    %v342 = vld [vmem:[%s340 + $0x4] sm:$0xf]
    %v343 = vunpack.c.l.bf16 %v341
    %v344 = vunpack.c.l.bf16 %v342
    %v345 = vstv %s104
    %v346 = vmul.f32 %v343, %v345
    %v347 = vmul.f32 %v344, %v345
    %v348 = vadd.f32 %v311, %v346
    %v349 = vadd.f32 %v312, %v347
    %v350 = vstv %s112
    %v351 = vmul.f32 %v343, %v350
    %v352 = vmul.f32 %v344, %v350
    %v353 = vadd.f32 %v316, %v351
    %v354 = vadd.f32 %v317, %v352
    %v355 = vstv %s120
    %v356 = vmul.f32 %v343, %v355
    %v357 = vmul.f32 %v344, %v355
    %v358 = vadd.f32 %v321, %v356
    %v359 = vadd.f32 %v322, %v357
    %v360 = vstv %s128
    %v361 = vmul.f32 %v343, %v360
    %v362 = vmul.f32 %v344, %v360
    %v363 = vadd.f32 %v326, %v361
    %v364 = vadd.f32 %v327, %v362
    %v365 = vstv %s136
    %v366 = vmul.f32 %v343, %v365
    %v367 = vmul.f32 %v344, %v365
    %v368 = vadd.f32 %v331, %v366
    %v369 = vadd.f32 %v332, %v367
    %v370 = vstv %s144
    %v371 = vmul.f32 %v343, %v370
    %v372 = vmul.f32 %v344, %v370
    %v373 = vadd.f32 %v336, %v371
    %v374 = vadd.f32 %v337, %v372
    %s375 = sadd.s32 0, 10
    %s376 = smul.addr %s375, 4
    %s377 = scalar_lea.vmem [#allocation3], %s376
    %v378 = vld [vmem:[%s377] sm:$0xf]
    %v379 = vld [vmem:[%s377 + $0x4] sm:$0xf]
    %v380 = vunpack.c.l.bf16 %v378
    %v381 = vunpack.c.l.bf16 %v379
    %v382 = vstv %s105
    %v383 = vmul.f32 %v380, %v382
    %v384 = vmul.f32 %v381, %v382
    %v385 = vadd.f32 %v348, %v383
    %v386 = vadd.f32 %v349, %v384
    %v387 = vstv %s113
    %v388 = vmul.f32 %v380, %v387
    %v389 = vmul.f32 %v381, %v387
    %v390 = vadd.f32 %v353, %v388
    %v391 = vadd.f32 %v354, %v389
    %v392 = vstv %s121
    %v393 = vmul.f32 %v380, %v392
    %v394 = vmul.f32 %v381, %v392
    %v395 = vadd.f32 %v358, %v393
    %v396 = vadd.f32 %v359, %v394
    %v397 = vstv %s129
    %v398 = vmul.f32 %v380, %v397
    %v399 = vmul.f32 %v381, %v397
    %v400 = vadd.f32 %v363, %v398
    %v401 = vadd.f32 %v364, %v399
    %v402 = vstv %s137
    %v403 = vmul.f32 %v380, %v402
    %v404 = vmul.f32 %v381, %v402
    %v405 = vadd.f32 %v368, %v403
    %v406 = vadd.f32 %v369, %v404
    %v407 = vstv %s145
    %v408 = vmul.f32 %v380, %v407
    %v409 = vmul.f32 %v381, %v407
    %v410 = vadd.f32 %v373, %v408
    %v411 = vadd.f32 %v374, %v409
    %s412 = sadd.s32 0, 12
    %s413 = smul.addr %s412, 4
    %s414 = scalar_lea.vmem [#allocation3], %s413
    %v415 = vld [vmem:[%s414] sm:$0xf]
    %v416 = vld [vmem:[%s414 + $0x4] sm:$0xf]
    %v417 = vunpack.c.l.bf16 %v415
    %v418 = vunpack.c.l.bf16 %v416
    %v419 = vstv %s106
    %v420 = vmul.f32 %v417, %v419
    %v421 = vmul.f32 %v418, %v419
    %v422 = vadd.f32 %v385, %v420
    %v423 = vadd.f32 %v386, %v421
    %v424 = vstv %s114
    %v425 = vmul.f32 %v417, %v424
    %v426 = vmul.f32 %v418, %v424
    %v427 = vadd.f32 %v390, %v425
    %v428 = vadd.f32 %v391, %v426
    %v429 = vstv %s122
    %v430 = vmul.f32 %v417, %v429
    %v431 = vmul.f32 %v418, %v429
    %v432 = vadd.f32 %v395, %v430
    %v433 = vadd.f32 %v396, %v431
    %v434 = vstv %s130
    %v435 = vmul.f32 %v417, %v434
    %v436 = vmul.f32 %v418, %v434
    %v437 = vadd.f32 %v400, %v435
    %v438 = vadd.f32 %v401, %v436
    %v439 = vstv %s138
    %v440 = vmul.f32 %v417, %v439
    %v441 = vmul.f32 %v418, %v439
    %v442 = vadd.f32 %v405, %v440
    %v443 = vadd.f32 %v406, %v441
    %v444 = vstv %s146
    %v445 = vmul.f32 %v417, %v444
    %v446 = vmul.f32 %v418, %v444
    %v447 = vadd.f32 %v410, %v445
    %v448 = vadd.f32 %v411, %v446
    %s449 = sadd.s32 0, 14
    %s450 = smul.addr %s449, 4
    %s451 = scalar_lea.vmem [#allocation3], %s450
    %v452 = vld [vmem:[%s451] sm:$0xf]
    %v453 = vld [vmem:[%s451 + $0x4] sm:$0xf]
    %v454 = vunpack.c.l.bf16 %v452
    %v455 = vunpack.c.l.bf16 %v453
    %v456 = vstv %s107
    %v457 = vmul.f32 %v454, %v456
    %v458 = vmul.f32 %v455, %v456
    %v459 = vadd.f32 %v422, %v457
    %v460 = vadd.f32 %v423, %v458
    %v461 = vstv %s115
    %v462 = vmul.f32 %v454, %v461
    %v463 = vmul.f32 %v455, %v461
    %v464 = vadd.f32 %v427, %v462
    %v465 = vadd.f32 %v428, %v463
    %v466 = vstv %s123
    %v467 = vmul.f32 %v454, %v466
    %v468 = vmul.f32 %v455, %v466
    %v469 = vadd.f32 %v432, %v467
    %v470 = vadd.f32 %v433, %v468
    %v471 = vstv %s131
    %v472 = vmul.f32 %v454, %v471
    %v473 = vmul.f32 %v455, %v471
    %v474 = vadd.f32 %v437, %v472
    %v475 = vadd.f32 %v438, %v473
    %v476 = vstv %s139
    %v477 = vmul.f32 %v454, %v476
    %v478 = vmul.f32 %v455, %v476
    %v479 = vadd.f32 %v442, %v477
    %v480 = vadd.f32 %v443, %v478
    %v481 = vstv %s147
    %v482 = vmul.f32 %v454, %v481
    %v483 = vmul.f32 %v455, %v481
    %v484 = vadd.f32 %v447, %v482
    %v485 = vadd.f32 %v448, %v483
    %v486 = vmul.f32 %v459, 0.5
    %v487 = vmul.f32 %v460, 0.5
    %v488 = vtanh.pop %v486
    %v489 = vtanh.pop %v487
    %v490 = vmul.f32 %v488, 0.5
    %v491 = vmul.f32 %v489, 0.5
    %v492 = vadd.f32 %v490, 0.5
    %v493 = vadd.f32 %v491, 0.5
    %v494 = vmul.f32 %v464, 0.5
    %v495 = vmul.f32 %v465, 0.5
    %v496 = vtanh.pop %v494
    %v497 = vtanh.pop %v495
    %v498 = vmul.f32 %v496, 0.5
    %v499 = vmul.f32 %v497, 0.5
    %v500 = vadd.f32 %v498, 0.5
    %v501 = vadd.f32 %v499, 0.5
    %v502 = vmul.f32 %v469, 0.5
    %v503 = vmul.f32 %v470, 0.5
    %v504 = vtanh.pop %v502
    %v505 = vtanh.pop %v503
    %v506 = vmul.f32 %v504, 0.5
    %v507 = vmul.f32 %v505, 0.5
    %v508 = vadd.f32 %v506, 0.5
    %v509 = vadd.f32 %v507, 0.5
    %v510 = vmul.f32 %v474, 0.5
    %v511 = vmul.f32 %v475, 0.5
    %v512 = vtanh.pop %v510
    %v513 = vtanh.pop %v511
    %v514 = vmul.f32 %v512, 0.5
    %v515 = vmul.f32 %v513, 0.5
    %v516 = vadd.f32 %v514, 0.5
    %v517 = vadd.f32 %v515, 0.5
    %v518 = vmul.f32 %v479, 0.5
    %v519 = vmul.f32 %v480, 0.5
    %v520 = vtanh.pop %v518
    %v521 = vtanh.pop %v519
    %v522 = vmul.f32 %v520, 0.5
    %v523 = vmul.f32 %v521, 0.5
    %v524 = vadd.f32 %v522, 0.5
    %v525 = vadd.f32 %v523, 0.5
    %v526 = vmul.f32 %v484, 0.5
    %v527 = vmul.f32 %v485, 0.5
    %v528 = vtanh.pop %v526
    %v529 = vtanh.pop %v527
    %v530 = vmul.f32 %v528, 0.5
    %v531 = vmul.f32 %v529, 0.5
    %v532 = vadd.f32 %v530, 0.5
    %v533 = vadd.f32 %v531, 0.5
    %v534 = vstv %s154
    %v535 = vmul.f32 %v492, %v534
    %v536 = vmul.f32 %v493, %v534
    %v537 = vstv %s178
    %v538 = vadd.f32 %v535, %v537
    %v539 = vadd.f32 %v536, %v537
    %v540 = vstv %s160
    %v541 = vmul.f32 %v492, %v540
    %v542 = vmul.f32 %v493, %v540
    %v543 = vstv %s179
    %v544 = vadd.f32 %v541, %v543
    %v545 = vadd.f32 %v542, %v543
    %v546 = vstv %s166
    %v547 = vmul.f32 %v492, %v546
    %v548 = vmul.f32 %v493, %v546
    %v549 = vstv %s180
    %v550 = vadd.f32 %v547, %v549
    %v551 = vadd.f32 %v548, %v549
    %v552 = vstv %s172
    %v553 = vmul.f32 %v492, %v552
    %v554 = vmul.f32 %v493, %v552
    %v555 = vstv %s181
    %v556 = vadd.f32 %v553, %v555
    %v557 = vadd.f32 %v554, %v555
    %v558 = vstv %s155
    %v559 = vmul.f32 %v500, %v558
    %v560 = vmul.f32 %v501, %v558
    %v561 = vadd.f32 %v538, %v559
    %v562 = vadd.f32 %v539, %v560
    %v563 = vstv %s161
    %v564 = vmul.f32 %v500, %v563
    %v565 = vmul.f32 %v501, %v563
    %v566 = vadd.f32 %v544, %v564
    %v567 = vadd.f32 %v545, %v565
    %v568 = vstv %s167
    %v569 = vmul.f32 %v500, %v568
    %v570 = vmul.f32 %v501, %v568
    %v571 = vadd.f32 %v550, %v569
    %v572 = vadd.f32 %v551, %v570
    %v573 = vstv %s173
    %v574 = vmul.f32 %v500, %v573
    %v575 = vmul.f32 %v501, %v573
    %v576 = vadd.f32 %v556, %v574
    %v577 = vadd.f32 %v557, %v575
    %v578 = vstv %s156
    %v579 = vmul.f32 %v508, %v578
    %v580 = vmul.f32 %v509, %v578
    %v581 = vadd.f32 %v561, %v579
    %v582 = vadd.f32 %v562, %v580
    %v583 = vstv %s162
    %v584 = vmul.f32 %v508, %v583
    %v585 = vmul.f32 %v509, %v583
    %v586 = vadd.f32 %v566, %v584
    %v587 = vadd.f32 %v567, %v585
    %v588 = vstv %s168
    %v589 = vmul.f32 %v508, %v588
    %v590 = vmul.f32 %v509, %v588
    %v591 = vadd.f32 %v571, %v589
    %v592 = vadd.f32 %v572, %v590
    %v593 = vstv %s174
    %v594 = vmul.f32 %v508, %v593
    %v595 = vmul.f32 %v509, %v593
    %v596 = vadd.f32 %v576, %v594
    %v597 = vadd.f32 %v577, %v595
    %v598 = vstv %s157
    %v599 = vmul.f32 %v516, %v598
    %v600 = vmul.f32 %v517, %v598
    %v601 = vadd.f32 %v581, %v599
    %v602 = vadd.f32 %v582, %v600
    %v603 = vstv %s163
    %v604 = vmul.f32 %v516, %v603
    %v605 = vmul.f32 %v517, %v603
    %v606 = vadd.f32 %v586, %v604
    %v607 = vadd.f32 %v587, %v605
    %v608 = vstv %s169
    %v609 = vmul.f32 %v516, %v608
    %v610 = vmul.f32 %v517, %v608
    %v611 = vadd.f32 %v591, %v609
    %v612 = vadd.f32 %v592, %v610
    %v613 = vstv %s175
    %v614 = vmul.f32 %v516, %v613
    %v615 = vmul.f32 %v517, %v613
    %v616 = vadd.f32 %v596, %v614
    %v617 = vadd.f32 %v597, %v615
    %v618 = vstv %s158
    %v619 = vmul.f32 %v524, %v618
    %v620 = vmul.f32 %v525, %v618
    %v621 = vadd.f32 %v601, %v619
    %v622 = vadd.f32 %v602, %v620
    %v623 = vstv %s164
    %v624 = vmul.f32 %v524, %v623
    %v625 = vmul.f32 %v525, %v623
    %v626 = vadd.f32 %v606, %v624
    %v627 = vadd.f32 %v607, %v625
    %v628 = vstv %s170
    %v629 = vmul.f32 %v524, %v628
    %v630 = vmul.f32 %v525, %v628
    %v631 = vadd.f32 %v611, %v629
    %v632 = vadd.f32 %v612, %v630
    %v633 = vstv %s176
    %v634 = vmul.f32 %v524, %v633
    %v635 = vmul.f32 %v525, %v633
    %v636 = vadd.f32 %v616, %v634
    %v637 = vadd.f32 %v617, %v635
    %v638 = vstv %s159
    %v639 = vmul.f32 %v532, %v638
    %v640 = vmul.f32 %v533, %v638
    %v641 = vadd.f32 %v621, %v639
    %v642 = vadd.f32 %v622, %v640
    %v643 = vstv %s165
    %v644 = vmul.f32 %v532, %v643
    %v645 = vmul.f32 %v533, %v643
    %v646 = vadd.f32 %v626, %v644
    %v647 = vadd.f32 %v627, %v645
    %v648 = vstv %s171
    %v649 = vmul.f32 %v532, %v648
    %v650 = vmul.f32 %v533, %v648
    %v651 = vadd.f32 %v631, %v649
    %v652 = vadd.f32 %v632, %v650
    %v653 = vstv %s177
    %v654 = vmul.f32 %v532, %v653
    %v655 = vmul.f32 %v533, %v653
    %v656 = vadd.f32 %v636, %v654
    %v657 = vadd.f32 %v637, %v655
    %v658 = vmul.f32 %v641, 0.5
    %v659 = vmul.f32 %v642, 0.5
    %v660 = vtanh.pop %v658
    %v661 = vtanh.pop %v659
    %v662 = vmul.f32 %v660, 0.5
    %v663 = vmul.f32 %v661, 0.5
    %v664 = vadd.f32 %v662, 0.5
    %v665 = vadd.f32 %v663, 0.5
    %v666 = vmul.f32 %v646, 0.5
    %v667 = vmul.f32 %v647, 0.5
    %v668 = vtanh.pop %v666
    %v669 = vtanh.pop %v667
    %v670 = vmul.f32 %v668, 0.5
    %v671 = vmul.f32 %v669, 0.5
    %v672 = vadd.f32 %v670, 0.5
    %v673 = vadd.f32 %v671, 0.5
    %v674 = vmul.f32 %v651, 0.5
    %v675 = vmul.f32 %v652, 0.5
    %v676 = vtanh.pop %v674
    %v677 = vtanh.pop %v675
    %v678 = vmul.f32 %v676, 0.5
    %v679 = vmul.f32 %v677, 0.5
    %v680 = vadd.f32 %v678, 0.5
    %v681 = vadd.f32 %v679, 0.5
    %v682 = vmul.f32 %v656, 0.5
    %v683 = vmul.f32 %v657, 0.5
    %v684 = vtanh.pop %v682
    %v685 = vtanh.pop %v683
    %v686 = vmul.f32 %v684, 0.5
    %v687 = vmul.f32 %v685, 0.5
    %v688 = vadd.f32 %v686, 0.5
    %v689 = vadd.f32 %v687, 0.5
    %v690 = vstv %s182
    %v691 = vmul.f32 %v664, %v690
    %v692 = vmul.f32 %v665, %v690
    %v693 = vstv %s186
    %v694 = vadd.f32 %v691, %v693
    %v695 = vadd.f32 %v692, %v693
    %v696 = vstv %s183
    %v697 = vmul.f32 %v672, %v696
    %v698 = vmul.f32 %v673, %v696
    %v699 = vadd.f32 %v694, %v697
    %v700 = vadd.f32 %v695, %v698
    %v701 = vstv %s184
    %v702 = vmul.f32 %v680, %v701
    %v703 = vmul.f32 %v681, %v701
    %v704 = vadd.f32 %v699, %v702
    %v705 = vadd.f32 %v700, %v703
    %v706 = vstv %s185
    %v707 = vmul.f32 %v688, %v706
    %v708 = vmul.f32 %v689, %v706
    %v709 = vadd.f32 %v704, %v707
    %v710 = vadd.f32 %v705, %v708
    %v711 = vmul.f32 %v709, 0.5
    %v712 = vmul.f32 %v710, 0.5
    %v713 = vtanh.pop %v711
    %v714 = vtanh.pop %v712
    %v715 = vmul.f32 %v713, 0.5
    %v716 = vmul.f32 %v714, 0.5
    %v717 = vadd.f32 %v715, 0.5
    %v718 = vadd.f32 %v716, 0.5
    %719 = vst [vmem:[#allocation15] sm:$0xff] %v717
    %720 = vst [vmem:[#allocation15 + $0x8] sm:$0xff] %v718
    // Predicated region
    $region54: #{tpu_custom_call.1} parent=1 // pred_check
      _
    $region55: #{tpu_custom_call.1} parent=1 // pred_check_branch
      %722 = sbr.rel (0) target = $region57
    $region56: #{tpu_custom_call.1} parent=1 // pred_region
      %s724 = ssub.s32 256, 256
      %725 = vsyncadd [#allocation5], %s724
      %s726 = sshll.u32 [#allocation15], 4
      %s727 = int_to_ptr.vmem [resolvable:$true] %s726
      %732 = dma.vmem_to_hbm [thread:$0]  %s727, 256, %s7, [#allocation5], 128, 128, 8
    $region57: #{tpu_custom_call.1} parent=1 // pred_fallthru
      _
    // Predicated region
    $region58: #{tpu_custom_call.1} parent=1 // pred_check
      _
    $region59: #{tpu_custom_call.1} parent=1 // pred_check_branch
      %734 = sbr.rel (0) target = $region61
    $region60: #{tpu_custom_call.1} parent=1 // pred_region
      %735 = dma.done [#allocation5], 256
    $region61: #{tpu_custom_call.1} parent=1 // pred_fallthru
      _
    %736 = vsyncpa [#allocation4], 1
    %737 = vsyncpa [#allocation5], 1
    %738 = vsyncpa [#allocation6], 1
    %739 = vsyncpa [#allocation7], 1
    %740 = vsyncpa [#allocation11], 1
    %741 = vsyncpa [#allocation14], 1

</llo_original>
